<compile_context>
chip_gen: v7x
topology: tpu7x:2x2x1
jax: 0.10.0
libtpu: 0.0.40
codegen_flags: <defaults>
</compile_context>

<pallas_src>
import functools

import jax
import jax.numpy as jnp
from jax.experimental import pallas as pl
from jax.experimental.pallas import tpu as pltpu


# ---------------- in-kernel helpers (VPU / EUP / XLU) ----------------------------

def _softplus(x):
    # numerically stable log(1 + exp(x))
    return jnp.maximum(x, 0.0) + jnp.log1p(jnp.exp(-jnp.abs(x)))


def _softmax_rows(x):
    m = jnp.max(x, axis=-1, keepdims=True)
    e = jnp.exp(x - m)
    s = jnp.sum(e, axis=-1, keepdims=True)
    # exact reciprocal keeps bit-level parity with the reference within 1e-5
    return e * pl.reciprocal(s, approx=False)


# ---------------- the fused forward kernel --------------------------------------

def oivae_kernel(x_ref, eps_ref, mask_ref,
                 w1_ref, b1_ref, w2_ref, b2_ref,
                 wms_ref, bms_ref,        # fused [fcMiu | fcSigma]   (h2, 2*dimZ)
                 wm_ref, bm_ref,          # fused [fcM1  | fcM2]      (dimZ, 2*dimZ)
                 wg_ref, bg_ref,          # block-diag [fcG1 (+) fcG2] (2*dimZ, 2*dimX)
                 gbn_ref, bbn_ref,        # fused BN gamma/beta        (1, 2*dimX)
                 recon_ref,
                 *, dimZ, dimX):
    x = x_ref[...]

    # --- VAEencoder.forward(x, bn=False) ---
    en1 = _softplus(jnp.dot(x, w1_ref[...],
                            preferred_element_type=jnp.float32) + b1_ref[...])
    en2 = _softplus(jnp.dot(en1, w2_ref[...],
                            preferred_element_type=jnp.float32) + b2_ref[...])

    # fused miu | sigma : one MXU push instead of two
    ms = jnp.dot(en2, wms_ref[...], preferred_element_type=jnp.float32) + bms_ref[...]
    miu = ms[:, :dimZ]
    sigma = ms[:, dimZ:]

    # --- getP (reparameterize + softmax + dropout 0.2, train mode) ---
    z = miu + jnp.exp(0.5 * sigma) * eps_ref[...]     # eps (1, dimZ) broadcast
    p = _softmax_rows(z) * mask_ref[...]              # mask already scaled by 1/0.8

    # --- OIVAEdecoder.forward(p, bn=True, clf=False) ---
    # fused za | zc (no slice needed: fed straight into the block-diagonal G matmul)
    zazc = jnp.dot(p, wm_ref[...], preferred_element_type=jnp.float32) + bm_ref[...]

    # block-diagonal G: y = [fcG1(za) | fcG2(zc)]  -> lane-dense (B, 2*dimX)
    y = jnp.dot(zazc, wg_ref[...], preferred_element_type=jnp.float32) + bg_ref[...]

    # fused training-mode BatchNorm1d on the full 2*dimX lanes (per-column stats,
    # identical to running BN1 / BN2 on each half separately)
    mean = jnp.mean(y, axis=0, keepdims=True)
    var = jnp.mean((y - mean) ** 2, axis=0, keepdims=True)
    scale = gbn_ref[...] * jax.lax.rsqrt(var + 1e-5)
    shift = bbn_ref[...] - mean * scale
    ybn = y * scale + shift

    # per-half row-softmax (softmax axis is dimX, so split the two halves here)
    rea = _softmax_rows(ybn[:, :dimX])
    rec = _softmax_rows(ybn[:, dimX:])
    recon_ref[...] = rea + rec


# ---------------- wrapper --------------------------------------------------------

@jax.jit
def oivae_forward(x, eps, mask_scaled, params):
    B, dimX = x.shape
    dimZ = eps.shape[1]

    # host-side one-time weight fusion (folded into the jit prologue)
    wms = jnp.concatenate([params["wmu"], params["wsig"]], axis=1)     # (h2, 2Z)
    bms = jnp.concatenate([params["bmu"], params["bsig"]], axis=1)     # (1, 2Z)
    wm = jnp.concatenate([params["wm1"], params["wm2"]], axis=1)       # (Z, 2Z)
    bm = jnp.concatenate([params["bm1"], params["bm2"]], axis=1)       # (1, 2Z)
    zblk = jnp.zeros((dimZ, dimX), jnp.float32)
    wg = jnp.concatenate(
        [jnp.concatenate([params["wg1"], zblk], axis=1),
         jnp.concatenate([zblk, params["wg2"]], axis=1)], axis=0)      # (2Z, 2X)
    bg = jnp.concatenate([params["bg1"], params["bg2"]], axis=1)       # (1, 2X)
    gbn = jnp.concatenate([params["gamma1"], params["gamma2"]], axis=1)
    bbn = jnp.concatenate([params["beta1"], params["beta2"]], axis=1)

    inputs = (x, eps, mask_scaled,
              params["w1"], params["b1"], params["w2"], params["b2"],
              wms, bms, wm, bm, wg, bg, gbn, bbn)

    vmem = lambda: pl.BlockSpec(memory_space=pltpu.MemorySpace.VMEM)
    kernel = functools.partial(oivae_kernel, dimZ=dimZ, dimX=dimX)
    return pl.pallas_call(
        kernel,
        out_shape=jax.ShapeDtypeStruct((B, dimX), jnp.float32),
        in_specs=[vmem() for _ in inputs],
        out_specs=vmem(),
    )(*inputs)


# ---------------- pure-JAX reference (unfused weights) ---------------------------

def oivae_reference(x, eps, mask_scaled, p_):
    lin = lambda a, w, b: a @ w + b
    en1 = jax.nn.softplus(lin(x, p_["w1"], p_["b1"]))
    en2 = jax.nn.softplus(lin(en1, p_["w2"], p_["b2"]))
    miu = lin(en2, p_["wmu"], p_["bmu"])
    sigma = lin(en2, p_["wsig"], p_["bsig"])
    z = miu + jnp.exp(0.5 * sigma) * eps
    p = jax.nn.softmax(z, axis=1) * mask_scaled
    za = lin(p, p_["wm1"], p_["bm1"])
    zc = lin(p, p_["wm2"], p_["bm2"])

    def bn(v, g, b):
        m = v.mean(0, keepdims=True)
        var = ((v - m) ** 2).mean(0, keepdims=True)
        return g * (v - m) / jnp.sqrt(var + 1e-5) + b

    rea = jax.nn.softmax(bn(lin(za, p_["wg1"], p_["bg1"]),
                            p_["gamma1"], p_["beta1"]), axis=1)
    rec = jax.nn.softmax(bn(lin(zc, p_["wg2"], p_["bg2"]),
                            p_["gamma2"], p_["beta2"]), axis=1)
    return rea + rec


# ---------------- parameter construction (deterministic, PyTorch-style init) -----

def init_params(key, dimX, dimZ, h1, h2):
    def linear(k, fan_in, fan_out):
        k1, k2 = jax.random.split(k)
        bound = 1.0 / jnp.sqrt(fan_in)
        w = jax.random.uniform(k1, (fan_in, fan_out), jnp.float32, -bound, bound)
        b = jax.random.uniform(k2, (1, fan_out), jnp.float32, -bound, bound)
        return w, b

    ks = jax.random.split(key, 8)
    p = {}
    p["w1"], p["b1"] = linear(ks[0], dimX, h1)        # fcEn1
    p["w2"], p["b2"] = linear(ks[1], h1, h2)          # fcEn2
    p["wmu"], p["bmu"] = linear(ks[2], h2, dimZ)      # fcMiu
    p["wsig"], p["bsig"] = linear(ks[3], h2, dimZ)    # fcSigma
    p["wm1"], p["bm1"] = linear(ks[4], dimZ, dimZ)    # fcM1
    p["wm2"], p["bm2"] = linear(ks[5], dimZ, dimZ)    # fcM2
    p["wg1"], p["bg1"] = linear(ks[6], dimZ, dimX)    # fcG1 (initMult == 0 path)
    p["wg2"], p["bg2"] = linear(ks[7], dimZ, dimX)    # fcG2
    # BatchNorm1d default init
    p["gamma1"] = jnp.ones((1, dimX), jnp.float32)
    p["beta1"] = jnp.zeros((1, dimX), jnp.float32)
    p["gamma2"] = jnp.ones((1, dimX), jnp.float32)
    p["beta2"] = jnp.zeros((1, dimX), jnp.float32)
    return p


if __name__ == "__main__":
    # B=128 fills one full MXU M-pass and amortizes launch overhead (perf feedback),
    # while feature dims stay at the module's small sizes.
    B, dimX, dimZ, h1, h2 = 128, 64, 16, 32, 32

    key = jax.random.PRNGKey(0)
    kx, keps, kmask, kparams = jax.random.split(key, 4)

    x = jax.random.uniform(kx, (B, dimX), jnp.float32)            # bag-of-words-ish input
    eps = jax.random.normal(keps, (1, dimZ), jnp.float32)         # torch.randn(1, dimZ)
    # Dropout(0.2) train-mode mask, pre-scaled by 1/keep so the kernel does one mul.
    mask_scaled = (jax.random.bernoulli(kmask, 0.8, (B, dimZ)).astype(jnp.float32)
                   * (1.0 / 0.8))
    params = init_params(kparams, dimX, dimZ, h1, h2)

    recon = jax.block_until_ready(oivae_forward(x, eps, mask_scaled, params))
    ref = jax.block_until_ready(oivae_reference(x, eps, mask_scaled, params))

    assert recon.shape == (B, dimX)
    assert jnp.all(jnp.isfinite(recon))
    assert jnp.allclose(recon, ref, atol=2e-5, rtol=1e-4), float(jnp.max(jnp.abs(recon - ref)))
    print("KERNEL_OK")
</pallas_src>

<mosaic_0001>
module attributes {stable_mosaic.version = 11 : i64} {
  func.func @oivae_kernel(%arg0: memref<128x64xf32, #tpu.memory_space<vmem>>, %arg1: memref<1x16xf32, #tpu.memory_space<vmem>>, %arg2: memref<128x16xf32, #tpu.memory_space<vmem>>, %arg3: memref<64x32xf32, #tpu.memory_space<vmem>>, %arg4: memref<1x32xf32, #tpu.memory_space<vmem>>, %arg5: memref<32x32xf32, #tpu.memory_space<vmem>>, %arg6: memref<1x32xf32, #tpu.memory_space<vmem>>, %arg7: memref<32x32xf32, #tpu.memory_space<vmem>>, %arg8: memref<1x32xf32, #tpu.memory_space<vmem>>, %arg9: memref<16x32xf32, #tpu.memory_space<vmem>>, %arg10: memref<1x32xf32, #tpu.memory_space<vmem>>, %arg11: memref<32x128xf32, #tpu.memory_space<vmem>>, %arg12: memref<1x128xf32, #tpu.memory_space<vmem>>, %arg13: memref<1x128xf32, #tpu.memory_space<vmem>>, %arg14: memref<1x128xf32, #tpu.memory_space<vmem>>, %arg15: memref<128x64xf32, #tpu.memory_space<vmem>>) attributes {dimension_semantics = [], scalar_prefetch = 0 : i64, scratch_operands = 0 : i64, tpu.core_type = #tpu.core_type<tc>} {
    %c0 = arith.constant 0 : index
    %c0_0 = arith.constant 0 : index
    %0 = vector.load %arg0[%c0, %c0_0] : memref<128x64xf32, #tpu.memory_space<vmem>>, vector<128x64xf32>
    %c0_1 = arith.constant 0 : index
    %c0_2 = arith.constant 0 : index
    %1 = vector.load %arg3[%c0_1, %c0_2] : memref<64x32xf32, #tpu.memory_space<vmem>>, vector<64x32xf32>
    %cst = arith.constant dense<0.000000e+00> : vector<128x32xf32>
    %2 = tpu.matmul %0, %1, %cst {dimension_numbers = #tpu.dot_dimension_numbers<[1], [0], [0], [1], [0, 0, 1, 1], [], []>} : vector<128x64xf32>, vector<64x32xf32>, vector<128x32xf32> -> vector<128x32xf32>
    %c0_3 = arith.constant 0 : index
    %c0_4 = arith.constant 0 : index
    %3 = vector.load %arg4[%c0_3, %c0_4] : memref<1x32xf32, #tpu.memory_space<vmem>>, vector<1x32xf32>
    %4 = vector.broadcast %3 : vector<1x32xf32> to vector<128x32xf32>
    %5 = arith.addf %2, %4 : vector<128x32xf32>
    %cst_5 = arith.constant 0.000000e+00 : f32
    %6 = vector.broadcast %cst_5 : f32 to vector<128x32xf32>
    %7 = arith.maximumf %5, %6 : vector<128x32xf32>
    %8 = math.absf %5 : vector<128x32xf32>
    %cst_6 = arith.constant 0.000000e+00 : f32
    %9 = vector.broadcast %cst_6 : f32 to vector<128x32xf32>
    %10 = arith.subf %9, %8 : vector<128x32xf32>
    %11 = math.exp %10 : vector<128x32xf32>
    %12 = math.log1p %11 : vector<128x32xf32>
    %13 = arith.addf %7, %12 : vector<128x32xf32>
    %c0_7 = arith.constant 0 : index
    %c0_8 = arith.constant 0 : index
    %14 = vector.load %arg5[%c0_7, %c0_8] : memref<32x32xf32, #tpu.memory_space<vmem>>, vector<32x32xf32>
    %cst_9 = arith.constant dense<0.000000e+00> : vector<128x32xf32>
    %15 = tpu.matmul %13, %14, %cst_9 {dimension_numbers = #tpu.dot_dimension_numbers<[1], [0], [0], [1], [0, 0, 1, 1], [], []>} : vector<128x32xf32>, vector<32x32xf32>, vector<128x32xf32> -> vector<128x32xf32>
    %c0_10 = arith.constant 0 : index
    %c0_11 = arith.constant 0 : index
    %16 = vector.load %arg6[%c0_10, %c0_11] : memref<1x32xf32, #tpu.memory_space<vmem>>, vector<1x32xf32>
    %17 = vector.broadcast %16 : vector<1x32xf32> to vector<128x32xf32>
    %18 = arith.addf %15, %17 : vector<128x32xf32>
    %cst_12 = arith.constant 0.000000e+00 : f32
    %19 = vector.broadcast %cst_12 : f32 to vector<128x32xf32>
    %20 = arith.maximumf %18, %19 : vector<128x32xf32>
    %21 = math.absf %18 : vector<128x32xf32>
    %cst_13 = arith.constant 0.000000e+00 : f32
    %22 = vector.broadcast %cst_13 : f32 to vector<128x32xf32>
    %23 = arith.subf %22, %21 : vector<128x32xf32>
    %24 = math.exp %23 : vector<128x32xf32>
    %25 = math.log1p %24 : vector<128x32xf32>
    %26 = arith.addf %20, %25 : vector<128x32xf32>
    %c0_14 = arith.constant 0 : index
    %c0_15 = arith.constant 0 : index
    %27 = vector.load %arg7[%c0_14, %c0_15] : memref<32x32xf32, #tpu.memory_space<vmem>>, vector<32x32xf32>
    %cst_16 = arith.constant dense<0.000000e+00> : vector<128x32xf32>
    %28 = tpu.matmul %26, %27, %cst_16 {dimension_numbers = #tpu.dot_dimension_numbers<[1], [0], [0], [1], [0, 0, 1, 1], [], []>} : vector<128x32xf32>, vector<32x32xf32>, vector<128x32xf32> -> vector<128x32xf32>
    %c0_17 = arith.constant 0 : index
    %c0_18 = arith.constant 0 : index
    %29 = vector.load %arg8[%c0_17, %c0_18] : memref<1x32xf32, #tpu.memory_space<vmem>>, vector<1x32xf32>
    %30 = vector.broadcast %29 : vector<1x32xf32> to vector<128x32xf32>
    %31 = arith.addf %28, %30 : vector<128x32xf32>
    %32 = vector.extract_strided_slice %31 {offsets = [0, 0], sizes = [128, 16], strides = [1, 1]} : vector<128x32xf32> to vector<128x16xf32>
    %33 = vector.extract_strided_slice %31 {offsets = [0, 16], sizes = [128, 16], strides = [1, 1]} : vector<128x32xf32> to vector<128x16xf32>
    %cst_19 = arith.constant 5.000000e-01 : f32
    %34 = vector.broadcast %cst_19 : f32 to vector<128x16xf32>
    %35 = arith.mulf %34, %33 : vector<128x16xf32>
    %36 = math.exp %35 : vector<128x16xf32>
    %c0_20 = arith.constant 0 : index
    %c0_21 = arith.constant 0 : index
    %37 = vector.load %arg1[%c0_20, %c0_21] : memref<1x16xf32, #tpu.memory_space<vmem>>, vector<1x16xf32>
    %38 = vector.broadcast %37 : vector<1x16xf32> to vector<128x16xf32>
    %39 = arith.mulf %36, %38 : vector<128x16xf32>
    %40 = arith.addf %32, %39 : vector<128x16xf32>
    %cst_22 = arith.constant dense<0xFF800000> : vector<128xf32>
    %41 = vector.multi_reduction <maximumf>, %40, %cst_22 [1] : vector<128x16xf32> to vector<128xf32>
    %42 = vector.shape_cast %41 : vector<128xf32> to vector<128x1xf32>
    %43 = vector.broadcast %42 : vector<128x1xf32> to vector<128x16xf32>
    %44 = arith.subf %40, %43 : vector<128x16xf32>
    %45 = math.exp %44 : vector<128x16xf32>
    %cst_23 = arith.constant dense<0.000000e+00> : vector<128xf32>
    %46 = vector.multi_reduction <add>, %45, %cst_23 [1] : vector<128x16xf32> to vector<128xf32>
    %47 = vector.shape_cast %46 : vector<128xf32> to vector<128x1xf32>
    %48 = tpu.reciprocal %47 : vector<128x1xf32> -> vector<128x1xf32>
    %49 = vector.broadcast %48 : vector<128x1xf32> to vector<128x16xf32>
    %50 = arith.mulf %45, %49 : vector<128x16xf32>
    %c0_24 = arith.constant 0 : index
    %c0_25 = arith.constant 0 : index
    %51 = vector.load %arg2[%c0_24, %c0_25] : memref<128x16xf32, #tpu.memory_space<vmem>>, vector<128x16xf32>
    %52 = arith.mulf %50, %51 : vector<128x16xf32>
    %c0_26 = arith.constant 0 : index
    %c0_27 = arith.constant 0 : index
    %53 = vector.load %arg9[%c0_26, %c0_27] : memref<16x32xf32, #tpu.memory_space<vmem>>, vector<16x32xf32>
    %cst_28 = arith.constant dense<0.000000e+00> : vector<128x32xf32>
    %54 = tpu.matmul %52, %53, %cst_28 {dimension_numbers = #tpu.dot_dimension_numbers<[1], [0], [0], [1], [0, 0, 1, 1], [], []>} : vector<128x16xf32>, vector<16x32xf32>, vector<128x32xf32> -> vector<128x32xf32>
    %c0_29 = arith.constant 0 : index
    %c0_30 = arith.constant 0 : index
    %55 = vector.load %arg10[%c0_29, %c0_30] : memref<1x32xf32, #tpu.memory_space<vmem>>, vector<1x32xf32>
    %56 = vector.broadcast %55 : vector<1x32xf32> to vector<128x32xf32>
    %57 = arith.addf %54, %56 : vector<128x32xf32>
    %c0_31 = arith.constant 0 : index
    %c0_32 = arith.constant 0 : index
    %58 = vector.load %arg11[%c0_31, %c0_32] : memref<32x128xf32, #tpu.memory_space<vmem>>, vector<32x128xf32>
    %cst_33 = arith.constant dense<0.000000e+00> : vector<128x128xf32>
    %59 = tpu.matmul %57, %58, %cst_33 {dimension_numbers = #tpu.dot_dimension_numbers<[1], [0], [0], [1], [0, 0, 1, 1], [], []>} : vector<128x32xf32>, vector<32x128xf32>, vector<128x128xf32> -> vector<128x128xf32>
    %c0_34 = arith.constant 0 : index
    %c0_35 = arith.constant 0 : index
    %60 = vector.load %arg12[%c0_34, %c0_35] : memref<1x128xf32, #tpu.memory_space<vmem>>, vector<1x128xf32>
    %61 = vector.broadcast %60 : vector<1x128xf32> to vector<128x128xf32>
    %62 = arith.addf %59, %61 : vector<128x128xf32>
    %cst_36 = arith.constant dense<0.000000e+00> : vector<128xf32>
    %63 = vector.multi_reduction <add>, %62, %cst_36 [0] : vector<128x128xf32> to vector<128xf32>
    %64 = vector.shape_cast %63 : vector<128xf32> to vector<1x128xf32>
    %cst_37 = arith.constant 1.280000e+02 : f32
    %65 = vector.broadcast %cst_37 : f32 to vector<1x128xf32>
    %66 = arith.divf %64, %65 : vector<1x128xf32>
    %67 = vector.broadcast %66 : vector<1x128xf32> to vector<128x128xf32>
    %68 = arith.subf %62, %67 : vector<128x128xf32>
    %69 = arith.mulf %68, %68 : vector<128x128xf32>
    %cst_38 = arith.constant dense<0.000000e+00> : vector<128xf32>
    %70 = vector.multi_reduction <add>, %69, %cst_38 [0] : vector<128x128xf32> to vector<128xf32>
    %71 = vector.shape_cast %70 : vector<128xf32> to vector<1x128xf32>
    %cst_39 = arith.constant 1.280000e+02 : f32
    %72 = vector.broadcast %cst_39 : f32 to vector<1x128xf32>
    %73 = arith.divf %71, %72 : vector<1x128xf32>
    %c0_40 = arith.constant 0 : index
    %c0_41 = arith.constant 0 : index
    %74 = vector.load %arg13[%c0_40, %c0_41] : memref<1x128xf32, #tpu.memory_space<vmem>>, vector<1x128xf32>
    %cst_42 = arith.constant 9.99999974E-6 : f32
    %75 = vector.broadcast %cst_42 : f32 to vector<1x128xf32>
    %76 = arith.addf %73, %75 : vector<1x128xf32>
    %77 = math.rsqrt %76 : vector<1x128xf32>
    %78 = arith.mulf %74, %77 : vector<1x128xf32>
    %c0_43 = arith.constant 0 : index
    %c0_44 = arith.constant 0 : index
    %79 = vector.load %arg14[%c0_43, %c0_44] : memref<1x128xf32, #tpu.memory_space<vmem>>, vector<1x128xf32>
    %80 = arith.mulf %66, %78 : vector<1x128xf32>
    %81 = arith.subf %79, %80 : vector<1x128xf32>
    %82 = vector.broadcast %78 : vector<1x128xf32> to vector<128x128xf32>
    %83 = arith.mulf %62, %82 : vector<128x128xf32>
    %84 = vector.broadcast %81 : vector<1x128xf32> to vector<128x128xf32>
    %85 = arith.addf %83, %84 : vector<128x128xf32>
    %86 = vector.extract_strided_slice %85 {offsets = [0, 0], sizes = [128, 64], strides = [1, 1]} : vector<128x128xf32> to vector<128x64xf32>
    %cst_45 = arith.constant dense<0xFF800000> : vector<128xf32>
    %87 = vector.multi_reduction <maximumf>, %86, %cst_45 [1] : vector<128x64xf32> to vector<128xf32>
    %88 = vector.shape_cast %87 : vector<128xf32> to vector<128x1xf32>
    %89 = vector.broadcast %88 : vector<128x1xf32> to vector<128x64xf32>
    %90 = arith.subf %86, %89 : vector<128x64xf32>
    %91 = math.exp %90 : vector<128x64xf32>
    %cst_46 = arith.constant dense<0.000000e+00> : vector<128xf32>
    %92 = vector.multi_reduction <add>, %91, %cst_46 [1] : vector<128x64xf32> to vector<128xf32>
    %93 = vector.shape_cast %92 : vector<128xf32> to vector<128x1xf32>
    %94 = tpu.reciprocal %93 : vector<128x1xf32> -> vector<128x1xf32>
    %95 = vector.broadcast %94 : vector<128x1xf32> to vector<128x64xf32>
    %96 = arith.mulf %91, %95 : vector<128x64xf32>
    %97 = vector.extract_strided_slice %85 {offsets = [0, 64], sizes = [128, 64], strides = [1, 1]} : vector<128x128xf32> to vector<128x64xf32>
    %cst_47 = arith.constant dense<0xFF800000> : vector<128xf32>
    %98 = vector.multi_reduction <maximumf>, %97, %cst_47 [1] : vector<128x64xf32> to vector<128xf32>
    %99 = vector.shape_cast %98 : vector<128xf32> to vector<128x1xf32>
    %100 = vector.broadcast %99 : vector<128x1xf32> to vector<128x64xf32>
    %101 = arith.subf %97, %100 : vector<128x64xf32>
    %102 = math.exp %101 : vector<128x64xf32>
    %cst_48 = arith.constant dense<0.000000e+00> : vector<128xf32>
    %103 = vector.multi_reduction <add>, %102, %cst_48 [1] : vector<128x64xf32> to vector<128xf32>
    %104 = vector.shape_cast %103 : vector<128xf32> to vector<128x1xf32>
    %105 = tpu.reciprocal %104 : vector<128x1xf32> -> vector<128x1xf32>
    %106 = vector.broadcast %105 : vector<128x1xf32> to vector<128x64xf32>
    %107 = arith.mulf %102, %106 : vector<128x64xf32>
    %108 = arith.addf %96, %107 : vector<128x64xf32>
    %c0_49 = arith.constant 0 : index
    %c0_50 = arith.constant 0 : index
    %109 = vector.load %arg15[%c0_49, %c0_50] : memref<128x64xf32, #tpu.memory_space<vmem>>, vector<128x64xf32>
    tpu.vector_store %arg15[%c0_49, %c0_50], %108 {strides = array<i32>} : memref<128x64xf32, #tpu.memory_space<vmem>>, vector<128x64xf32>,
    return
  }
}

</mosaic_0001>

<llo_original>
// kernel: oivae_forward.1
$region0: #{oivae_forward.1}
  #allocation0 [shape = 'u32[]', space=smem, size = 0x4, offset = 0x4, fixed_abs, tag = 'smem constant byte address 0x4 - core index']
  #allocation1 [shape = 'u32[144,128]{1,0:T(1,128)}', space=vmem, size = 0x12000, scoped, tag = 'internal scratch']
  %s0 = inlined_call_operand.vmem [shape: f32[128,64], index: 0, kind: input, shape index: {}]
  %s1 = inlined_call_operand.vmem [shape: f32[1,16], index: 1, kind: input, shape index: {}]
  %s2 = inlined_call_operand.vmem [shape: f32[128,16], index: 2, kind: input, shape index: {}]
  %s3 = inlined_call_operand.vmem [shape: f32[64,32], index: 3, kind: input, shape index: {}]
  %s4 = inlined_call_operand.vmem [shape: f32[1,32], index: 4, kind: input, shape index: {}]
  %s5 = inlined_call_operand.vmem [shape: f32[32,32], index: 5, kind: input, shape index: {}]
  %s6 = inlined_call_operand.vmem [shape: f32[1,32], index: 6, kind: input, shape index: {}]
  %s7 = inlined_call_operand.vmem [shape: f32[32,32], index: 7, kind: input, shape index: {}]
  %s8 = inlined_call_operand.vmem [shape: f32[1,32], index: 8, kind: input, shape index: {}]
  %s9 = inlined_call_operand.vmem [shape: f32[16,32], index: 9, kind: input, shape index: {}]
  %s10 = inlined_call_operand.vmem [shape: f32[1,32], index: 10, kind: input, shape index: {}]
  %s11 = inlined_call_operand.vmem [shape: f32[32,128], index: 11, kind: input, shape index: {}]
  %s12 = inlined_call_operand.vmem [shape: f32[1,128], index: 12, kind: input, shape index: {}]
  %s13 = inlined_call_operand.vmem [shape: f32[1,128], index: 13, kind: input, shape index: {}]
  %s14 = inlined_call_operand.vmem [shape: f32[1,128], index: 14, kind: input, shape index: {}]
  %s15 = inlined_call_operand.vmem [shape: f32[128,64], index: 15, kind: output, shape index: {}]
  %s16 = sld [smem:[#allocation0]]
  $region70: #{oivae_forward.1} parent=0
    _
  %s18 = ssub.s32 1, %s16
  %s19 = scalar_select 0, %s18, %s16
  // Predicated region
  $region2: #{oivae_forward.1} parent=0 // pred_check
    _
  $region3: #{oivae_forward.1} parent=0 // pred_check_branch
    %21 = sbr.rel (0) target = $region5
  $region4: #{oivae_forward.1} parent=0 // pred_region
    _
  $region5: #{oivae_forward.1} parent=0 // pred_fallthru
    _
  // Predicated region
  $region6: #{oivae_forward.1} parent=0 // pred_check
    _
  $region7: #{oivae_forward.1} parent=0 // pred_check_branch
    %23 = sbr.rel (0) target = $region9
  $region8: #{oivae_forward.1} parent=0 // pred_region
    _
  $region9: #{oivae_forward.1} parent=0 // pred_fallthru
    _
  // Predicated region
  $region10: #{oivae_forward.1} parent=0 // pred_check
    _
  $region11: #{oivae_forward.1} parent=0 // pred_check_branch
    %25 = sbr.rel (0) target = $region13
  $region12: #{oivae_forward.1} parent=0 // pred_region
    _
  $region13: #{oivae_forward.1} parent=0 // pred_fallthru
    _
  // Predicated region
  $region14: #{oivae_forward.1} parent=0 // pred_check
    _
  $region15: #{oivae_forward.1} parent=0 // pred_check_branch
    %27 = sbr.rel (0) target = $region17
  $region16: #{oivae_forward.1} parent=0 // pred_region
    _
  $region17: #{oivae_forward.1} parent=0 // pred_fallthru
    _
  // Predicated region
  $region18: #{oivae_forward.1} parent=0 // pred_check
    _
  $region19: #{oivae_forward.1} parent=0 // pred_check_branch
    %29 = sbr.rel (0) target = $region21
  $region20: #{oivae_forward.1} parent=0 // pred_region
    _
  $region21: #{oivae_forward.1} parent=0 // pred_fallthru
    _
  // Predicated region
  $region22: #{oivae_forward.1} parent=0 // pred_check
    _
  $region23: #{oivae_forward.1} parent=0 // pred_check_branch
    %31 = sbr.rel (0) target = $region25
  $region24: #{oivae_forward.1} parent=0 // pred_region
    _
  $region25: #{oivae_forward.1} parent=0 // pred_fallthru
    _
  // Predicated region
  $region26: #{oivae_forward.1} parent=0 // pred_check
    _
  $region27: #{oivae_forward.1} parent=0 // pred_check_branch
    %33 = sbr.rel (0) target = $region29
  $region28: #{oivae_forward.1} parent=0 // pred_region
    _
  $region29: #{oivae_forward.1} parent=0 // pred_fallthru
    _
  // Predicated region
  $region30: #{oivae_forward.1} parent=0 // pred_check
    _
  $region31: #{oivae_forward.1} parent=0 // pred_check_branch
    %35 = sbr.rel (0) target = $region33
  $region32: #{oivae_forward.1} parent=0 // pred_region
    _
  $region33: #{oivae_forward.1} parent=0 // pred_fallthru
    _
  // Predicated region
  $region34: #{oivae_forward.1} parent=0 // pred_check
    _
  $region35: #{oivae_forward.1} parent=0 // pred_check_branch
    %37 = sbr.rel (0) target = $region37
  $region36: #{oivae_forward.1} parent=0 // pred_region
    _
  $region37: #{oivae_forward.1} parent=0 // pred_fallthru
    _
  // Predicated region
  $region38: #{oivae_forward.1} parent=0 // pred_check
    _
  $region39: #{oivae_forward.1} parent=0 // pred_check_branch
    %39 = sbr.rel (0) target = $region41
  $region40: #{oivae_forward.1} parent=0 // pred_region
    _
  $region41: #{oivae_forward.1} parent=0 // pred_fallthru
    _
  // Predicated region
  $region42: #{oivae_forward.1} parent=0 // pred_check
    _
  $region43: #{oivae_forward.1} parent=0 // pred_check_branch
    %41 = sbr.rel (0) target = $region45
  $region44: #{oivae_forward.1} parent=0 // pred_region
    _
  $region45: #{oivae_forward.1} parent=0 // pred_fallthru
    _
  // Predicated region
  $region46: #{oivae_forward.1} parent=0 // pred_check
    _
  $region47: #{oivae_forward.1} parent=0 // pred_check_branch
    %43 = sbr.rel (0) target = $region49
  $region48: #{oivae_forward.1} parent=0 // pred_region
    _
  $region49: #{oivae_forward.1} parent=0 // pred_fallthru
    _
  // Predicated region
  $region50: #{oivae_forward.1} parent=0 // pred_check
    _
  $region51: #{oivae_forward.1} parent=0 // pred_check_branch
    %45 = sbr.rel (0) target = $region53
  $region52: #{oivae_forward.1} parent=0 // pred_region
    _
  $region53: #{oivae_forward.1} parent=0 // pred_fallthru
    _
  // Predicated region
  $region54: #{oivae_forward.1} parent=0 // pred_check
    _
  $region55: #{oivae_forward.1} parent=0 // pred_check_branch
    %47 = sbr.rel (0) target = $region57
  $region56: #{oivae_forward.1} parent=0 // pred_region
    _
  $region57: #{oivae_forward.1} parent=0 // pred_fallthru
    _
  // Predicated region
  $region58: #{oivae_forward.1} parent=0 // pred_check
    _
  $region59: #{oivae_forward.1} parent=0 // pred_check_branch
    %49 = sbr.rel (0) target = $region61
  $region60: #{oivae_forward.1} parent=0 // pred_region
    _
  $region61: #{oivae_forward.1} parent=0 // pred_fallthru
    _
  %v50 = vld [vmem:[%s0] sm:$0xff]
  %v51 = vld [vmem:[%s0 + $0x8] sm:$0xff]
  %v52 = vld [vmem:[%s0 + $0x10] sm:$0xff]
  %v53 = vld [vmem:[%s0 + $0x18] sm:$0xff]
  %v54 = vld [vmem:[%s0 + $0x20] sm:$0xff]
  %v55 = vld [vmem:[%s0 + $0x28] sm:$0xff]
  %v56 = vld [vmem:[%s0 + $0x30] sm:$0xff]
  %v57 = vld [vmem:[%s0 + $0x38] sm:$0xff]
  %v58 = vld [vmem:[%s0 + $0x40] sm:$0xff]
  %v59 = vld [vmem:[%s0 + $0x48] sm:$0xff]
  %v60 = vld [vmem:[%s0 + $0x50] sm:$0xff]
  %v61 = vld [vmem:[%s0 + $0x58] sm:$0xff]
  %v62 = vld [vmem:[%s0 + $0x60] sm:$0xff]
  %v63 = vld [vmem:[%s0 + $0x68] sm:$0xff]
  %v64 = vld [vmem:[%s0 + $0x70] sm:$0xff]
  %v65 = vld [vmem:[%s0 + $0x78] sm:$0xff]
  %v66 = vld [vmem:[%s3] sm:$0xff]
  %v67 = vld [vmem:[%s3 + $0x8] sm:$0xff]
  %v68 = vld [vmem:[%s3 + $0x10] sm:$0xff]
  %v69 = vld [vmem:[%s3 + $0x18] sm:$0xff]
  %v70 = vld [vmem:[%s3 + $0x20] sm:$0xff]
  %v71 = vld [vmem:[%s3 + $0x28] sm:$0xff]
  %v72 = vld [vmem:[%s3 + $0x30] sm:$0xff]
  %v73 = vld [vmem:[%s3 + $0x38] sm:$0xff]
  %v74 = vld [vmem:[%s4] sm:$0x1]
  %v76 = vlaneseq
  %v77 = vshrl.u32 %v76, 7
  %v78 = vsub.s32 0, %v77
  %v79 = vrot.slane %v74, %v78
  %vm81 = vcmask 523264
  %v83 = vsel %vm81, %v50, 0
  %v86 = vsel %vm81, %v51, 0
  %v89 = vsel %vm81, %v52, 0
  %v92 = vsel %vm81, %v53, 0
  %v95 = vsel %vm81, %v54, 0
  %v98 = vsel %vm81, %v55, 0
  %v101 = vsel %vm81, %v56, 0
  %v104 = vsel %vm81, %v57, 0
  %v107 = vsel %vm81, %v58, 0
  %v110 = vsel %vm81, %v59, 0
  %v113 = vsel %vm81, %v60, 0
  %v116 = vsel %vm81, %v61, 0
  %v119 = vsel %vm81, %v62, 0
  %v122 = vsel %vm81, %v63, 0
  %v125 = vsel %vm81, %v64, 0
  %v128 = vsel %vm81, %v65, 0
  %130 = vmatprep.subr.mxu0 0.0
  %131 = vmatpush1.msra.mxu0 %v66
  %132 = vmatprep.subr.mxu0 0.0
  %133 = vmatpush1.msra.mxu0 %v67
  %134 = vmatprep.subr.mxu0 0.0
  %135 = vmatpush1.msra.mxu0 %v68
  %136 = vmatprep.subr.mxu0 0.0
  %137 = vmatpush1.msra.mxu0 %v69
  %138 = vmatprep.subr.mxu0 0.0
  %139 = vmatpush1.msra.mxu0 %v70
  %140 = vmatprep.subr.mxu0 0.0
  %141 = vmatpush1.msra.mxu0 %v71
  %142 = vmatprep.subr.mxu0 0.0
  %143 = vmatpush1.msra.mxu0 %v72
  %144 = vmatprep.subr.mxu0 0.0
  %145 = vmatpush1.msra.mxu0 %v73
  %146 = vmatprep.subr.mxu0 0.0
  %147 = vmatpush1.msra.mxu0 0.0
  %148 = vmatprep.subr.mxu0 0.0
  %149 = vmatpush1.msra.mxu0 0.0
  %150 = vmatprep.subr.mxu0 0.0
  %151 = vmatpush1.msra.mxu0 0.0
  %152 = vmatprep.subr.mxu0 0.0
  %153 = vmatpush1.msra.mxu0 0.0
  %154 = vmatprep.subr.mxu0 0.0
  %155 = vmatpush1.msra.mxu0 0.0
  %156 = vmatprep.subr.mxu0 0.0
  %157 = vmatpush1.msra.mxu0 0.0
  %158 = vmatprep.subr.mxu0 0.0
  %159 = vmatpush1.msra.mxu0 0.0
  %160 = vmatprep.subr.mxu0 0.0
  %161 = vmatpush1.msra.mxu0 0.0
  %162 = vmatprep.subr.mxu0 0.0
  %163 = vmatpush1.msra.mxu0 0.0
  %164 = vmatprep.subr.mxu0 0.0
  %165 = vmatpush1.msra.mxu0 0.0
  %166 = vmatprep.subr.mxu0 0.0
  %167 = vmatpush1.msra.mxu0 0.0
  %168 = vmatprep.subr.mxu0 0.0
  %169 = vmatpush1.msra.mxu0 0.0
  %170 = vmatprep.subr.mxu0 0.0
  %171 = vmatpush1.msra.mxu0 0.0
  %172 = vmatprep.subr.mxu0 0.0
  %173 = vmatpush1.msra.mxu0 0.0
  %174 = vmatprep.subr.mxu0 0.0
  %175 = vmatpush1.msra.mxu0 0.0
  %176 = vmatprep.subr.mxu0 0.0
  %177 = vmatpush1.msra.mxu0 0.0
  %178 = vmatprep.subr.mxu0 0.0
  %179 = vmatpush1.msra.mxu0 0.0
  %180 = vmatprep.subr.mxu0 0.0
  %181 = vmatpush1.msra.mxu0 0.0
  %182 = vmatprep.subr.mxu0 0.0
  %183 = vmatpush1.msra.mxu0 0.0
  %184 = vmatprep.subr.mxu0 0.0
  %185 = vmatpush1.msra.mxu0 0.0
  %186 = vmatprep.subr.mxu0 0.0
  %187 = vmatpush1.msra.mxu0 0.0
  %188 = vmatprep.subr.mxu0 0.0
  %189 = vmatpush1.msra.mxu0 0.0
  %190 = vmatprep.subr.mxu0 0.0
  %191 = vmatpush1.msra.mxu0 0.0
  %192 = vmatprep.subr.mxu0 0.0
  %193 = vmatpush1.msra.mxu0 0.0
  %194 = vmatprep.mubr.f32.mxu0 0.0
  %195 = vmatmul.mubr.f32.gmra.mrb[0].mxu0 %v83
  %v196 = vpop.f32.mrb[0].mxu0
  %v197 = vadd.f32 %v79, %v196
  %v198 = vpop.f32.mrb[0].mxu0
  %199 = vmatprep.mubr.f32.mxu0 0.0
  %200 = vmatmul.mubr.f32.gmra.mrb[0].mxu0 %v86
  %v201 = vpop.f32.mrb[0].mxu0
  %v202 = vadd.f32 %v79, %v201
  %v203 = vpop.f32.mrb[0].mxu0
  %204 = vmatprep.mubr.f32.mxu0 0.0
  %205 = vmatmul.mubr.f32.gmra.mrb[0].mxu0 %v89
  %v206 = vpop.f32.mrb[0].mxu0
  %v207 = vadd.f32 %v79, %v206
  %v208 = vpop.f32.mrb[0].mxu0
  %209 = vmatprep.mubr.f32.mxu0 0.0
  %210 = vmatmul.mubr.f32.gmra.mrb[0].mxu0 %v92
  %v211 = vpop.f32.mrb[0].mxu0
  %v212 = vadd.f32 %v79, %v211
  %v213 = vpop.f32.mrb[0].mxu0
  %214 = vmatprep.mubr.f32.mxu0 0.0
  %215 = vmatmul.mubr.f32.gmra.mrb[0].mxu0 %v95
  %v216 = vpop.f32.mrb[0].mxu0
  %v217 = vadd.f32 %v79, %v216
  %v218 = vpop.f32.mrb[0].mxu0
  %219 = vmatprep.mubr.f32.mxu0 0.0
  %220 = vmatmul.mubr.f32.gmra.mrb[0].mxu0 %v98
  %v221 = vpop.f32.mrb[0].mxu0
  %v222 = vadd.f32 %v79, %v221
  %v223 = vpop.f32.mrb[0].mxu0
  %224 = vmatprep.mubr.f32.mxu0 0.0
  %225 = vmatmul.mubr.f32.gmra.mrb[0].mxu0 %v101
  %v226 = vpop.f32.mrb[0].mxu0
  %v227 = vadd.f32 %v79, %v226
  %v228 = vpop.f32.mrb[0].mxu0
  %229 = vmatprep.mubr.f32.mxu0 0.0
  %230 = vmatmul.mubr.f32.gmra.mrb[0].mxu0 %v104
  %v231 = vpop.f32.mrb[0].mxu0
  %v232 = vadd.f32 %v79, %v231
  %v233 = vpop.f32.mrb[0].mxu0
  %234 = vmatprep.mubr.f32.mxu0 0.0
  %235 = vmatmul.mubr.f32.gmra.mrb[0].mxu0 %v107
  %v236 = vpop.f32.mrb[0].mxu0
  %v237 = vadd.f32 %v79, %v236
  %v238 = vpop.f32.mrb[0].mxu0
  %239 = vmatprep.mubr.f32.mxu0 0.0
  %240 = vmatmul.mubr.f32.gmra.mrb[0].mxu0 %v110
  %v241 = vpop.f32.mrb[0].mxu0
  %v242 = vadd.f32 %v79, %v241
  %v243 = vpop.f32.mrb[0].mxu0
  %244 = vmatprep.mubr.f32.mxu0 0.0
  %245 = vmatmul.mubr.f32.gmra.mrb[0].mxu0 %v113
  %v246 = vpop.f32.mrb[0].mxu0
  %v247 = vadd.f32 %v79, %v246
  %v248 = vpop.f32.mrb[0].mxu0
  %249 = vmatprep.mubr.f32.mxu0 0.0
  %250 = vmatmul.mubr.f32.gmra.mrb[0].mxu0 %v116
  %v251 = vpop.f32.mrb[0].mxu0
  %v252 = vadd.f32 %v79, %v251
  %v253 = vpop.f32.mrb[0].mxu0
  %254 = vmatprep.mubr.f32.mxu0 0.0
  %255 = vmatmul.mubr.f32.gmra.mrb[0].mxu0 %v119
  %v256 = vpop.f32.mrb[0].mxu0
  %v257 = vadd.f32 %v79, %v256
  %v258 = vpop.f32.mrb[0].mxu0
  %259 = vmatprep.mubr.f32.mxu0 0.0
  %260 = vmatmul.mubr.f32.gmra.mrb[0].mxu0 %v122
  %v261 = vpop.f32.mrb[0].mxu0
  %v262 = vadd.f32 %v79, %v261
  %v263 = vpop.f32.mrb[0].mxu0
  %264 = vmatprep.mubr.f32.mxu0 0.0
  %265 = vmatmul.mubr.f32.gmra.mrb[0].mxu0 %v125
  %v266 = vpop.f32.mrb[0].mxu0
  %v267 = vadd.f32 %v79, %v266
  %v268 = vpop.f32.mrb[0].mxu0
  %269 = vmatprep.mubr.f32.mxu0 0.0
  %270 = vmatmul.mubr.f32.gmra.mrb[0].mxu0 %v128
  %v271 = vpop.f32.mrb[0].mxu0
  %v272 = vadd.f32 %v79, %v271
  %v273 = vpop.f32.mrb[0].mxu0
  %274 = vdwg.mxu0
  %v275 = vmax.f32 %v197, 0.0
  %v276 = vmax.f32 %v202, 0.0
  %v277 = vmax.f32 %v207, 0.0
  %v278 = vmax.f32 %v212, 0.0
  %v279 = vmax.f32 %v217, 0.0
  %v280 = vmax.f32 %v222, 0.0
  %v281 = vmax.f32 %v227, 0.0
  %v282 = vmax.f32 %v232, 0.0
  %v283 = vmax.f32 %v237, 0.0
  %v284 = vmax.f32 %v242, 0.0
  %v285 = vmax.f32 %v247, 0.0
  %v286 = vmax.f32 %v252, 0.0
  %v287 = vmax.f32 %v257, 0.0
  %v288 = vmax.f32 %v262, 0.0
  %v289 = vmax.f32 %v267, 0.0
  %v290 = vmax.f32 %v272, 0.0
  %v291 = vand.u32 2147483647, %v197
  %v292 = vand.u32 2147483647, %v202
  %v293 = vand.u32 2147483647, %v207
  %v294 = vand.u32 2147483647, %v212
  %v295 = vand.u32 2147483647, %v217
  %v296 = vand.u32 2147483647, %v222
  %v297 = vand.u32 2147483647, %v227
  %v298 = vand.u32 2147483647, %v232
  %v299 = vand.u32 2147483647, %v237
  %v300 = vand.u32 2147483647, %v242
  %v301 = vand.u32 2147483647, %v247
  %v302 = vand.u32 2147483647, %v252
  %v303 = vand.u32 2147483647, %v257
  %v304 = vand.u32 2147483647, %v262
  %v305 = vand.u32 2147483647, %v267
  %v306 = vand.u32 2147483647, %v272
  %v307 = vsub.f32 0.0, %v291
  %v308 = vsub.f32 0.0, %v292
  %v309 = vsub.f32 0.0, %v293
  %v310 = vsub.f32 0.0, %v294
  %v311 = vsub.f32 0.0, %v295
  %v312 = vsub.f32 0.0, %v296
  %v313 = vsub.f32 0.0, %v297
  %v314 = vsub.f32 0.0, %v298
  %v315 = vsub.f32 0.0, %v299
  %v316 = vsub.f32 0.0, %v300
  %v317 = vsub.f32 0.0, %v301
  %v318 = vsub.f32 0.0, %v302
  %v319 = vsub.f32 0.0, %v303
  %v320 = vsub.f32 0.0, %v304
  %v321 = vsub.f32 0.0, %v305
  %v322 = vsub.f32 0.0, %v306
  %v323 = vmul.f32 %v307, 1.442695
  %v324 = vpow.pop %v323
  %v325 = vmul.f32 %v308, 1.442695
  %v326 = vpow.pop %v325
  %v327 = vmul.f32 %v309, 1.442695
  %v328 = vpow.pop %v327
  %v329 = vmul.f32 %v310, 1.442695
  %v330 = vpow.pop %v329
  %v331 = vmul.f32 %v311, 1.442695
  %v332 = vpow.pop %v331
  %v333 = vmul.f32 %v312, 1.442695
  %v334 = vpow.pop %v333
  %v335 = vmul.f32 %v313, 1.442695
  %v336 = vpow.pop %v335
  %v337 = vmul.f32 %v314, 1.442695
  %v338 = vpow.pop %v337
  %v339 = vmul.f32 %v315, 1.442695
  %v340 = vpow.pop %v339
  %v341 = vmul.f32 %v316, 1.442695
  %v342 = vpow.pop %v341
  %v343 = vmul.f32 %v317, 1.442695
  %v344 = vpow.pop %v343
  %v345 = vmul.f32 %v318, 1.442695
  %v346 = vpow.pop %v345
  %v347 = vmul.f32 %v319, 1.442695
  %v348 = vpow.pop %v347
  %v349 = vmul.f32 %v320, 1.442695
  %v350 = vpow.pop %v349
  %v351 = vmul.f32 %v321, 1.442695
  %v352 = vpow.pop %v351
  %v353 = vmul.f32 %v322, 1.442695
  %v354 = vpow.pop %v353
  %v355 = vadd.f32 %v324, 1.0
  %v356 = vlog2.pop %v355
  %v357 = vmul.f32 %v356, 0.6931472
  %v358 = vmul.f32 -0.5, %v324
  %v359 = vadd.f32 %v358, 1.0
  %v360 = vmul.f32 %v359, %v324
  %v361 = vand.u32 2147483647, %v324
  %vm362 = vcmp.lt.f32.partialorder %v361, 0.0004427343
  %v363 = vsel %vm362, %v360, %v357
  %v364 = vadd.f32 %v326, 1.0
  %v365 = vlog2.pop %v364
  %v366 = vmul.f32 %v365, 0.6931472
  %v367 = vmul.f32 -0.5, %v326
  %v368 = vadd.f32 %v367, 1.0
  %v369 = vmul.f32 %v368, %v326
  %v370 = vand.u32 2147483647, %v326
  %vm371 = vcmp.lt.f32.partialorder %v370, 0.0004427343
  %v372 = vsel %vm371, %v369, %v366
  %v373 = vadd.f32 %v328, 1.0
  %v374 = vlog2.pop %v373
  %v375 = vmul.f32 %v374, 0.6931472
  %v376 = vmul.f32 -0.5, %v328
  %v377 = vadd.f32 %v376, 1.0
  %v378 = vmul.f32 %v377, %v328
  %v379 = vand.u32 2147483647, %v328
  %vm380 = vcmp.lt.f32.partialorder %v379, 0.0004427343
  %v381 = vsel %vm380, %v378, %v375
  %v382 = vadd.f32 %v330, 1.0
  %v383 = vlog2.pop %v382
  %v384 = vmul.f32 %v383, 0.6931472
  %v385 = vmul.f32 -0.5, %v330
  %v386 = vadd.f32 %v385, 1.0
  %v387 = vmul.f32 %v386, %v330
  %v388 = vand.u32 2147483647, %v330
  %vm389 = vcmp.lt.f32.partialorder %v388, 0.0004427343
  %v390 = vsel %vm389, %v387, %v384
  %v391 = vadd.f32 %v332, 1.0
  %v392 = vlog2.pop %v391
  %v393 = vmul.f32 %v392, 0.6931472
  %v394 = vmul.f32 -0.5, %v332
  %v395 = vadd.f32 %v394, 1.0
  %v396 = vmul.f32 %v395, %v332
  %v397 = vand.u32 2147483647, %v332
  %vm398 = vcmp.lt.f32.partialorder %v397, 0.0004427343
  %v399 = vsel %vm398, %v396, %v393
  %v400 = vadd.f32 %v334, 1.0
  %v401 = vlog2.pop %v400
  %v402 = vmul.f32 %v401, 0.6931472
  %v403 = vmul.f32 -0.5, %v334
  %v404 = vadd.f32 %v403, 1.0
  %v405 = vmul.f32 %v404, %v334
  %v406 = vand.u32 2147483647, %v334
  %vm407 = vcmp.lt.f32.partialorder %v406, 0.0004427343
  %v408 = vsel %vm407, %v405, %v402
  %v409 = vadd.f32 %v336, 1.0
  %v410 = vlog2.pop %v409
  %v411 = vmul.f32 %v410, 0.6931472
  %v412 = vmul.f32 -0.5, %v336
  %v413 = vadd.f32 %v412, 1.0
  %v414 = vmul.f32 %v413, %v336
  %v415 = vand.u32 2147483647, %v336
  %vm416 = vcmp.lt.f32.partialorder %v415, 0.0004427343
  %v417 = vsel %vm416, %v414, %v411
  %v418 = vadd.f32 %v338, 1.0
  %v419 = vlog2.pop %v418
  %v420 = vmul.f32 %v419, 0.6931472
  %v421 = vmul.f32 -0.5, %v338
  %v422 = vadd.f32 %v421, 1.0
  %v423 = vmul.f32 %v422, %v338
  %v424 = vand.u32 2147483647, %v338
  %vm425 = vcmp.lt.f32.partialorder %v424, 0.0004427343
  %v426 = vsel %vm425, %v423, %v420
  %v427 = vadd.f32 %v340, 1.0
  %v428 = vlog2.pop %v427
  %v429 = vmul.f32 %v428, 0.6931472
  %v430 = vmul.f32 -0.5, %v340
  %v431 = vadd.f32 %v430, 1.0
  %v432 = vmul.f32 %v431, %v340
  %v433 = vand.u32 2147483647, %v340
  %vm434 = vcmp.lt.f32.partialorder %v433, 0.0004427343
  %v435 = vsel %vm434, %v432, %v429
  %v436 = vadd.f32 %v342, 1.0
  %v437 = vlog2.pop %v436
  %v438 = vmul.f32 %v437, 0.6931472
  %v439 = vmul.f32 -0.5, %v342
  %v440 = vadd.f32 %v439, 1.0
  %v441 = vmul.f32 %v440, %v342
  %v442 = vand.u32 2147483647, %v342
  %vm443 = vcmp.lt.f32.partialorder %v442, 0.0004427343
  %v444 = vsel %vm443, %v441, %v438
  %v445 = vadd.f32 %v344, 1.0
  %v446 = vlog2.pop %v445
  %v447 = vmul.f32 %v446, 0.6931472
  %v448 = vmul.f32 -0.5, %v344
  %v449 = vadd.f32 %v448, 1.0
  %v450 = vmul.f32 %v449, %v344
  %v451 = vand.u32 2147483647, %v344
  %vm452 = vcmp.lt.f32.partialorder %v451, 0.0004427343
  %v453 = vsel %vm452, %v450, %v447
  %v454 = vadd.f32 %v346, 1.0
  %v455 = vlog2.pop %v454
  %v456 = vmul.f32 %v455, 0.6931472
  %v457 = vmul.f32 -0.5, %v346
  %v458 = vadd.f32 %v457, 1.0
  %v459 = vmul.f32 %v458, %v346
  %v460 = vand.u32 2147483647, %v346
  %vm461 = vcmp.lt.f32.partialorder %v460, 0.0004427343
  %v462 = vsel %vm461, %v459, %v456
  %v463 = vadd.f32 %v348, 1.0
  %v464 = vlog2.pop %v463
  %v465 = vmul.f32 %v464, 0.6931472
  %v466 = vmul.f32 -0.5, %v348
  %v467 = vadd.f32 %v466, 1.0
  %v468 = vmul.f32 %v467, %v348
  %v469 = vand.u32 2147483647, %v348
  %vm470 = vcmp.lt.f32.partialorder %v469, 0.0004427343
  %v471 = vsel %vm470, %v468, %v465
  %v472 = vadd.f32 %v350, 1.0
  %v473 = vlog2.pop %v472
  %v474 = vmul.f32 %v473, 0.6931472
  %v475 = vmul.f32 -0.5, %v350
  %v476 = vadd.f32 %v475, 1.0
  %v477 = vmul.f32 %v476, %v350
  %v478 = vand.u32 2147483647, %v350
  %vm479 = vcmp.lt.f32.partialorder %v478, 0.0004427343
  %v480 = vsel %vm479, %v477, %v474
  %v481 = vadd.f32 %v352, 1.0
  %v482 = vlog2.pop %v481
  %v483 = vmul.f32 %v482, 0.6931472
  %v484 = vmul.f32 -0.5, %v352
  %v485 = vadd.f32 %v484, 1.0
  %v486 = vmul.f32 %v485, %v352
  %v487 = vand.u32 2147483647, %v352
  %vm488 = vcmp.lt.f32.partialorder %v487, 0.0004427343
  %v489 = vsel %vm488, %v486, %v483
  %v490 = vadd.f32 %v354, 1.0
  %v491 = vlog2.pop %v490
  %v492 = vmul.f32 %v491, 0.6931472
  %v493 = vmul.f32 -0.5, %v354
  %v494 = vadd.f32 %v493, 1.0
  %v495 = vmul.f32 %v494, %v354
  %v496 = vand.u32 2147483647, %v354
  %vm497 = vcmp.lt.f32.partialorder %v496, 0.0004427343
  %v498 = vsel %vm497, %v495, %v492
  %v499 = vadd.f32 %v275, %v363
  %v500 = vadd.f32 %v276, %v372
  %v501 = vadd.f32 %v277, %v381
  %v502 = vadd.f32 %v278, %v390
  %v503 = vadd.f32 %v279, %v399
  %v504 = vadd.f32 %v280, %v408
  %v505 = vadd.f32 %v281, %v417
  %v506 = vadd.f32 %v282, %v426
  %v507 = vadd.f32 %v283, %v435
  %v508 = vadd.f32 %v284, %v444
  %v509 = vadd.f32 %v285, %v453
  %v510 = vadd.f32 %v286, %v462
  %v511 = vadd.f32 %v287, %v471
  %v512 = vadd.f32 %v288, %v480
  %v513 = vadd.f32 %v289, %v489
  %v514 = vadd.f32 %v290, %v498
  %v515 = vld [vmem:[%s5] sm:$0xff]
  %v516 = vld [vmem:[%s5 + $0x8] sm:$0xff]
  %v517 = vld [vmem:[%s5 + $0x10] sm:$0xff]
  %v518 = vld [vmem:[%s5 + $0x18] sm:$0xff]
  %v519 = vld [vmem:[%s6] sm:$0x1]
  %v521 = vlaneseq
  %v522 = vshrl.u32 %v521, 7
  %v523 = vsub.s32 0, %v522
  %v524 = vrot.slane %v519, %v523
  %vm526 = vcmask 261120
  %v528 = vsel %vm526, %v499, 0
  %v531 = vsel %vm526, %v500, 0
  %v534 = vsel %vm526, %v501, 0
  %v537 = vsel %vm526, %v502, 0
  %v540 = vsel %vm526, %v503, 0
  %v543 = vsel %vm526, %v504, 0
  %v546 = vsel %vm526, %v505, 0
  %v549 = vsel %vm526, %v506, 0
  %v552 = vsel %vm526, %v507, 0
  %v555 = vsel %vm526, %v508, 0
  %v558 = vsel %vm526, %v509, 0
  %v561 = vsel %vm526, %v510, 0
  %v564 = vsel %vm526, %v511, 0
  %v567 = vsel %vm526, %v512, 0
  %v570 = vsel %vm526, %v513, 0
  %v573 = vsel %vm526, %v514, 0
  %575 = vmatprep.subr.mxu0 0.0
  %576 = vmatpush1.msra.mxu0 %v515
  %577 = vmatprep.subr.mxu0 0.0
  %578 = vmatpush1.msra.mxu0 %v516
  %579 = vmatprep.subr.mxu0 0.0
  %580 = vmatpush1.msra.mxu0 %v517
  %581 = vmatprep.subr.mxu0 0.0
  %582 = vmatpush1.msra.mxu0 %v518
  %583 = vmatprep.subr.mxu0 0.0
  %584 = vmatpush1.msra.mxu0 0.0
  %585 = vmatprep.subr.mxu0 0.0
  %586 = vmatpush1.msra.mxu0 0.0
  %587 = vmatprep.subr.mxu0 0.0
  %588 = vmatpush1.msra.mxu0 0.0
  %589 = vmatprep.subr.mxu0 0.0
  %590 = vmatpush1.msra.mxu0 0.0
  %591 = vmatprep.subr.mxu0 0.0
  %592 = vmatpush1.msra.mxu0 0.0
  %593 = vmatprep.subr.mxu0 0.0
  %594 = vmatpush1.msra.mxu0 0.0
  %595 = vmatprep.subr.mxu0 0.0
  %596 = vmatpush1.msra.mxu0 0.0
  %597 = vmatprep.subr.mxu0 0.0
  %598 = vmatpush1.msra.mxu0 0.0
  %599 = vmatprep.subr.mxu0 0.0
  %600 = vmatpush1.msra.mxu0 0.0
  %601 = vmatprep.subr.mxu0 0.0
  %602 = vmatpush1.msra.mxu0 0.0
  %603 = vmatprep.subr.mxu0 0.0
  %604 = vmatpush1.msra.mxu0 0.0
  %605 = vmatprep.subr.mxu0 0.0
  %606 = vmatpush1.msra.mxu0 0.0
  %607 = vmatprep.subr.mxu0 0.0
  %608 = vmatpush1.msra.mxu0 0.0
  %609 = vmatprep.subr.mxu0 0.0
  %610 = vmatpush1.msra.mxu0 0.0
  %611 = vmatprep.subr.mxu0 0.0
  %612 = vmatpush1.msra.mxu0 0.0
  %613 = vmatprep.subr.mxu0 0.0
  %614 = vmatpush1.msra.mxu0 0.0
  %615 = vmatprep.subr.mxu0 0.0
  %616 = vmatpush1.msra.mxu0 0.0
  %617 = vmatprep.subr.mxu0 0.0
  %618 = vmatpush1.msra.mxu0 0.0
  %619 = vmatprep.subr.mxu0 0.0
  %620 = vmatpush1.msra.mxu0 0.0
  %621 = vmatprep.subr.mxu0 0.0
  %622 = vmatpush1.msra.mxu0 0.0
  %623 = vmatprep.subr.mxu0 0.0
  %624 = vmatpush1.msra.mxu0 0.0
  %625 = vmatprep.subr.mxu0 0.0
  %626 = vmatpush1.msra.mxu0 0.0
  %627 = vmatprep.subr.mxu0 0.0
  %628 = vmatpush1.msra.mxu0 0.0
  %629 = vmatprep.subr.mxu0 0.0
  %630 = vmatpush1.msra.mxu0 0.0
  %631 = vmatprep.subr.mxu0 0.0
  %632 = vmatpush1.msra.mxu0 0.0
  %633 = vmatprep.subr.mxu0 0.0
  %634 = vmatpush1.msra.mxu0 0.0
  %635 = vmatprep.subr.mxu0 0.0
  %636 = vmatpush1.msra.mxu0 0.0
  %637 = vmatprep.subr.mxu0 0.0
  %638 = vmatpush1.msra.mxu0 0.0
  %639 = vmatprep.mubr.f32.mxu0 0.0
  %640 = vmatmul.mubr.f32.gmra.mrb[0].mxu0 %v528
  %v641 = vpop.f32.mrb[0].mxu0
  %v642 = vadd.f32 %v524, %v641
  %v643 = vpop.f32.mrb[0].mxu0
  %644 = vmatprep.mubr.f32.mxu0 0.0
  %645 = vmatmul.mubr.f32.gmra.mrb[0].mxu0 %v531
  %v646 = vpop.f32.mrb[0].mxu0
  %v647 = vadd.f32 %v524, %v646
  %v648 = vpop.f32.mrb[0].mxu0
  %649 = vmatprep.mubr.f32.mxu0 0.0
  %650 = vmatmul.mubr.f32.gmra.mrb[0].mxu0 %v534
  %v651 = vpop.f32.mrb[0].mxu0
  %v652 = vadd.f32 %v524, %v651
  %v653 = vpop.f32.mrb[0].mxu0
  %654 = vmatprep.mubr.f32.mxu0 0.0
  %655 = vmatmul.mubr.f32.gmra.mrb[0].mxu0 %v537
  %v656 = vpop.f32.mrb[0].mxu0
  %v657 = vadd.f32 %v524, %v656
  %v658 = vpop.f32.mrb[0].mxu0
  %659 = vmatprep.mubr.f32.mxu0 0.0
  %660 = vmatmul.mubr.f32.gmra.mrb[0].mxu0 %v540
  %v661 = vpop.f32.mrb[0].mxu0
  %v662 = vadd.f32 %v524, %v661
  %v663 = vpop.f32.mrb[0].mxu0
  %664 = vmatprep.mubr.f32.mxu0 0.0
  %665 = vmatmul.mubr.f32.gmra.mrb[0].mxu0 %v543
  %v666 = vpop.f32.mrb[0].mxu0
  %v667 = vadd.f32 %v524, %v666
  %v668 = vpop.f32.mrb[0].mxu0
  %669 = vmatprep.mubr.f32.mxu0 0.0
  %670 = vmatmul.mubr.f32.gmra.mrb[0].mxu0 %v546
  %v671 = vpop.f32.mrb[0].mxu0
  %v672 = vadd.f32 %v524, %v671
  %v673 = vpop.f32.mrb[0].mxu0
  %674 = vmatprep.mubr.f32.mxu0 0.0
  %675 = vmatmul.mubr.f32.gmra.mrb[0].mxu0 %v549
  %v676 = vpop.f32.mrb[0].mxu0
  %v677 = vadd.f32 %v524, %v676
  %v678 = vpop.f32.mrb[0].mxu0
  %679 = vmatprep.mubr.f32.mxu0 0.0
  %680 = vmatmul.mubr.f32.gmra.mrb[0].mxu0 %v552
  %v681 = vpop.f32.mrb[0].mxu0
  %v682 = vadd.f32 %v524, %v681
  %v683 = vpop.f32.mrb[0].mxu0
  %684 = vmatprep.mubr.f32.mxu0 0.0
  %685 = vmatmul.mubr.f32.gmra.mrb[0].mxu0 %v555
  %v686 = vpop.f32.mrb[0].mxu0
  %v687 = vadd.f32 %v524, %v686
  %v688 = vpop.f32.mrb[0].mxu0
  %689 = vmatprep.mubr.f32.mxu0 0.0
  %690 = vmatmul.mubr.f32.gmra.mrb[0].mxu0 %v558
  %v691 = vpop.f32.mrb[0].mxu0
  %v692 = vadd.f32 %v524, %v691
  %v693 = vpop.f32.mrb[0].mxu0
  %694 = vmatprep.mubr.f32.mxu0 0.0
  %695 = vmatmul.mubr.f32.gmra.mrb[0].mxu0 %v561
  %v696 = vpop.f32.mrb[0].mxu0
  %v697 = vadd.f32 %v524, %v696
  %v698 = vpop.f32.mrb[0].mxu0
  %699 = vmatprep.mubr.f32.mxu0 0.0
  %700 = vmatmul.mubr.f32.gmra.mrb[0].mxu0 %v564
  %v701 = vpop.f32.mrb[0].mxu0
  %v702 = vadd.f32 %v524, %v701
  %v703 = vpop.f32.mrb[0].mxu0
  %704 = vmatprep.mubr.f32.mxu0 0.0
  %705 = vmatmul.mubr.f32.gmra.mrb[0].mxu0 %v567
  %v706 = vpop.f32.mrb[0].mxu0
  %v707 = vadd.f32 %v524, %v706
  %v708 = vpop.f32.mrb[0].mxu0
  %709 = vmatprep.mubr.f32.mxu0 0.0
  %710 = vmatmul.mubr.f32.gmra.mrb[0].mxu0 %v570
  %v711 = vpop.f32.mrb[0].mxu0
  %v712 = vadd.f32 %v524, %v711
  %v713 = vpop.f32.mrb[0].mxu0
  %714 = vmatprep.mubr.f32.mxu0 0.0
  %715 = vmatmul.mubr.f32.gmra.mrb[0].mxu0 %v573
  %v716 = vpop.f32.mrb[0].mxu0
  %v717 = vadd.f32 %v524, %v716
  %v718 = vpop.f32.mrb[0].mxu0
  %719 = vdwg.mxu0
  %v720 = vmax.f32 %v642, 0.0
  %v721 = vmax.f32 %v647, 0.0
  %v722 = vmax.f32 %v652, 0.0
  %v723 = vmax.f32 %v657, 0.0
  %v724 = vmax.f32 %v662, 0.0
  %v725 = vmax.f32 %v667, 0.0
  %v726 = vmax.f32 %v672, 0.0
  %v727 = vmax.f32 %v677, 0.0
  %v728 = vmax.f32 %v682, 0.0
  %v729 = vmax.f32 %v687, 0.0
  %v730 = vmax.f32 %v692, 0.0
  %v731 = vmax.f32 %v697, 0.0
  %v732 = vmax.f32 %v702, 0.0
  %v733 = vmax.f32 %v707, 0.0
  %v734 = vmax.f32 %v712, 0.0
  %v735 = vmax.f32 %v717, 0.0
  %v736 = vand.u32 2147483647, %v642
  %v737 = vand.u32 2147483647, %v647
  %v738 = vand.u32 2147483647, %v652
  %v739 = vand.u32 2147483647, %v657
  %v740 = vand.u32 2147483647, %v662
  %v741 = vand.u32 2147483647, %v667
  %v742 = vand.u32 2147483647, %v672
  %v743 = vand.u32 2147483647, %v677
  %v744 = vand.u32 2147483647, %v682
  %v745 = vand.u32 2147483647, %v687
  %v746 = vand.u32 2147483647, %v692
  %v747 = vand.u32 2147483647, %v697
  %v748 = vand.u32 2147483647, %v702
  %v749 = vand.u32 2147483647, %v707
  %v750 = vand.u32 2147483647, %v712
  %v751 = vand.u32 2147483647, %v717
  %v752 = vsub.f32 0.0, %v736
  %v753 = vsub.f32 0.0, %v737
  %v754 = vsub.f32 0.0, %v738
  %v755 = vsub.f32 0.0, %v739
  %v756 = vsub.f32 0.0, %v740
  %v757 = vsub.f32 0.0, %v741
  %v758 = vsub.f32 0.0, %v742
  %v759 = vsub.f32 0.0, %v743
  %v760 = vsub.f32 0.0, %v744
  %v761 = vsub.f32 0.0, %v745
  %v762 = vsub.f32 0.0, %v746
  %v763 = vsub.f32 0.0, %v747
  %v764 = vsub.f32 0.0, %v748
  %v765 = vsub.f32 0.0, %v749
  %v766 = vsub.f32 0.0, %v750
  %v767 = vsub.f32 0.0, %v751
  %v768 = vmul.f32 %v752, 1.442695
  %v769 = vpow.pop %v768
  %v770 = vmul.f32 %v753, 1.442695
  %v771 = vpow.pop %v770
  %v772 = vmul.f32 %v754, 1.442695
  %v773 = vpow.pop %v772
  %v774 = vmul.f32 %v755, 1.442695
  %v775 = vpow.pop %v774
  %v776 = vmul.f32 %v756, 1.442695
  %v777 = vpow.pop %v776
  %v778 = vmul.f32 %v757, 1.442695
  %v779 = vpow.pop %v778
  %v780 = vmul.f32 %v758, 1.442695
  %v781 = vpow.pop %v780
  %v782 = vmul.f32 %v759, 1.442695
  %v783 = vpow.pop %v782
  %v784 = vmul.f32 %v760, 1.442695
  %v785 = vpow.pop %v784
  %v786 = vmul.f32 %v761, 1.442695
  %v787 = vpow.pop %v786
  %v788 = vmul.f32 %v762, 1.442695
  %v789 = vpow.pop %v788
  %v790 = vmul.f32 %v763, 1.442695
  %v791 = vpow.pop %v790
  %v792 = vmul.f32 %v764, 1.442695
  %v793 = vpow.pop %v792
  %v794 = vmul.f32 %v765, 1.442695
  %v795 = vpow.pop %v794
  %v796 = vmul.f32 %v766, 1.442695
  %v797 = vpow.pop %v796
  %v798 = vmul.f32 %v767, 1.442695
  %v799 = vpow.pop %v798
  %v800 = vadd.f32 %v769, 1.0
  %v801 = vlog2.pop %v800
  %v802 = vmul.f32 %v801, 0.6931472
  %v803 = vmul.f32 -0.5, %v769
  %v804 = vadd.f32 %v803, 1.0
  %v805 = vmul.f32 %v804, %v769
  %v806 = vand.u32 2147483647, %v769
  %vm807 = vcmp.lt.f32.partialorder %v806, 0.0004427343
  %v808 = vsel %vm807, %v805, %v802
  %v809 = vadd.f32 %v771, 1.0
  %v810 = vlog2.pop %v809
  %v811 = vmul.f32 %v810, 0.6931472
  %v812 = vmul.f32 -0.5, %v771
  %v813 = vadd.f32 %v812, 1.0
  %v814 = vmul.f32 %v813, %v771
  %v815 = vand.u32 2147483647, %v771
  %vm816 = vcmp.lt.f32.partialorder %v815, 0.0004427343
  %v817 = vsel %vm816, %v814, %v811
  %v818 = vadd.f32 %v773, 1.0
  %v819 = vlog2.pop %v818
  %v820 = vmul.f32 %v819, 0.6931472
  %v821 = vmul.f32 -0.5, %v773
  %v822 = vadd.f32 %v821, 1.0
  %v823 = vmul.f32 %v822, %v773
  %v824 = vand.u32 2147483647, %v773
  %vm825 = vcmp.lt.f32.partialorder %v824, 0.0004427343
  %v826 = vsel %vm825, %v823, %v820
  %v827 = vadd.f32 %v775, 1.0
  %v828 = vlog2.pop %v827
  %v829 = vmul.f32 %v828, 0.6931472
  %v830 = vmul.f32 -0.5, %v775
  %v831 = vadd.f32 %v830, 1.0
  %v832 = vmul.f32 %v831, %v775
  %v833 = vand.u32 2147483647, %v775
  %vm834 = vcmp.lt.f32.partialorder %v833, 0.0004427343
  %v835 = vsel %vm834, %v832, %v829
  %v836 = vadd.f32 %v777, 1.0
  %v837 = vlog2.pop %v836
  %v838 = vmul.f32 %v837, 0.6931472
  %v839 = vmul.f32 -0.5, %v777
  %v840 = vadd.f32 %v839, 1.0
  %v841 = vmul.f32 %v840, %v777
  %v842 = vand.u32 2147483647, %v777
  %vm843 = vcmp.lt.f32.partialorder %v842, 0.0004427343
  %v844 = vsel %vm843, %v841, %v838
  %v845 = vadd.f32 %v779, 1.0
  %v846 = vlog2.pop %v845
  %v847 = vmul.f32 %v846, 0.6931472
  %v848 = vmul.f32 -0.5, %v779
  %v849 = vadd.f32 %v848, 1.0
  %v850 = vmul.f32 %v849, %v779
  %v851 = vand.u32 2147483647, %v779
  %vm852 = vcmp.lt.f32.partialorder %v851, 0.0004427343
  %v853 = vsel %vm852, %v850, %v847
  %v854 = vadd.f32 %v781, 1.0
  %v855 = vlog2.pop %v854
  %v856 = vmul.f32 %v855, 0.6931472
  %v857 = vmul.f32 -0.5, %v781
  %v858 = vadd.f32 %v857, 1.0
  %v859 = vmul.f32 %v858, %v781
  %v860 = vand.u32 2147483647, %v781
  %vm861 = vcmp.lt.f32.partialorder %v860, 0.0004427343
  %v862 = vsel %vm861, %v859, %v856
  %v863 = vadd.f32 %v783, 1.0
  %v864 = vlog2.pop %v863
  %v865 = vmul.f32 %v864, 0.6931472
  %v866 = vmul.f32 -0.5, %v783
  %v867 = vadd.f32 %v866, 1.0
  %v868 = vmul.f32 %v867, %v783
  %v869 = vand.u32 2147483647, %v783
  %vm870 = vcmp.lt.f32.partialorder %v869, 0.0004427343
  %v871 = vsel %vm870, %v868, %v865
  %v872 = vadd.f32 %v785, 1.0
  %v873 = vlog2.pop %v872
  %v874 = vmul.f32 %v873, 0.6931472
  %v875 = vmul.f32 -0.5, %v785
  %v876 = vadd.f32 %v875, 1.0
  %v877 = vmul.f32 %v876, %v785
  %v878 = vand.u32 2147483647, %v785
  %vm879 = vcmp.lt.f32.partialorder %v878, 0.0004427343
  %v880 = vsel %vm879, %v877, %v874
  %v881 = vadd.f32 %v787, 1.0
  %v882 = vlog2.pop %v881
  %v883 = vmul.f32 %v882, 0.6931472
  %v884 = vmul.f32 -0.5, %v787
  %v885 = vadd.f32 %v884, 1.0
  %v886 = vmul.f32 %v885, %v787
  %v887 = vand.u32 2147483647, %v787
  %vm888 = vcmp.lt.f32.partialorder %v887, 0.0004427343
  %v889 = vsel %vm888, %v886, %v883
  %v890 = vadd.f32 %v789, 1.0
  %v891 = vlog2.pop %v890
  %v892 = vmul.f32 %v891, 0.6931472
  %v893 = vmul.f32 -0.5, %v789
  %v894 = vadd.f32 %v893, 1.0
  %v895 = vmul.f32 %v894, %v789
  %v896 = vand.u32 2147483647, %v789
  %vm897 = vcmp.lt.f32.partialorder %v896, 0.0004427343
  %v898 = vsel %vm897, %v895, %v892
  %v899 = vadd.f32 %v791, 1.0
  %v900 = vlog2.pop %v899
  %v901 = vmul.f32 %v900, 0.6931472
  %v902 = vmul.f32 -0.5, %v791
  %v903 = vadd.f32 %v902, 1.0
  %v904 = vmul.f32 %v903, %v791
  %v905 = vand.u32 2147483647, %v791
  %vm906 = vcmp.lt.f32.partialorder %v905, 0.0004427343
  %v907 = vsel %vm906, %v904, %v901
  %v908 = vadd.f32 %v793, 1.0
  %v909 = vlog2.pop %v908
  %v910 = vmul.f32 %v909, 0.6931472
  %v911 = vmul.f32 -0.5, %v793
  %v912 = vadd.f32 %v911, 1.0
  %v913 = vmul.f32 %v912, %v793
  %v914 = vand.u32 2147483647, %v793
  %vm915 = vcmp.lt.f32.partialorder %v914, 0.0004427343
  %v916 = vsel %vm915, %v913, %v910
  %v917 = vadd.f32 %v795, 1.0
  %v918 = vlog2.pop %v917
  %v919 = vmul.f32 %v918, 0.6931472
  %v920 = vmul.f32 -0.5, %v795
  %v921 = vadd.f32 %v920, 1.0
  %v922 = vmul.f32 %v921, %v795
  %v923 = vand.u32 2147483647, %v795
  %vm924 = vcmp.lt.f32.partialorder %v923, 0.0004427343
  %v925 = vsel %vm924, %v922, %v919
  %v926 = vadd.f32 %v797, 1.0
  %v927 = vlog2.pop %v926
  %v928 = vmul.f32 %v927, 0.6931472
  %v929 = vmul.f32 -0.5, %v797
  %v930 = vadd.f32 %v929, 1.0
  %v931 = vmul.f32 %v930, %v797
  %v932 = vand.u32 2147483647, %v797
  %vm933 = vcmp.lt.f32.partialorder %v932, 0.0004427343
  %v934 = vsel %vm933, %v931, %v928
  %v935 = vadd.f32 %v799, 1.0
  %v936 = vlog2.pop %v935
  %v937 = vmul.f32 %v936, 0.6931472
  %v938 = vmul.f32 -0.5, %v799
  %v939 = vadd.f32 %v938, 1.0
  %v940 = vmul.f32 %v939, %v799
  %v941 = vand.u32 2147483647, %v799
  %vm942 = vcmp.lt.f32.partialorder %v941, 0.0004427343
  %v943 = vsel %vm942, %v940, %v937
  %v944 = vadd.f32 %v720, %v808
  %v945 = vadd.f32 %v721, %v817
  %v946 = vadd.f32 %v722, %v826
  %v947 = vadd.f32 %v723, %v835
  %v948 = vadd.f32 %v724, %v844
  %v949 = vadd.f32 %v725, %v853
  %v950 = vadd.f32 %v726, %v862
  %v951 = vadd.f32 %v727, %v871
  %v952 = vadd.f32 %v728, %v880
  %v953 = vadd.f32 %v729, %v889
  %v954 = vadd.f32 %v730, %v898
  %v955 = vadd.f32 %v731, %v907
  %v956 = vadd.f32 %v732, %v916
  %v957 = vadd.f32 %v733, %v925
  %v958 = vadd.f32 %v734, %v934
  %v959 = vadd.f32 %v735, %v943
  %v960 = vld [vmem:[%s7] sm:$0xff]
  %v961 = vld [vmem:[%s7 + $0x8] sm:$0xff]
  %v962 = vld [vmem:[%s7 + $0x10] sm:$0xff]
  %v963 = vld [vmem:[%s7 + $0x18] sm:$0xff]
  %v964 = vld [vmem:[%s8] sm:$0x1]
  %v966 = vlaneseq
  %v967 = vshrl.u32 %v966, 7
  %v968 = vsub.s32 0, %v967
  %v969 = vrot.slane %v964, %v968
  %v972 = vsel %vm526, %v944, 0
  %v975 = vsel %vm526, %v945, 0
  %v978 = vsel %vm526, %v946, 0
  %v981 = vsel %vm526, %v947, 0
  %v984 = vsel %vm526, %v948, 0
  %v987 = vsel %vm526, %v949, 0
  %v990 = vsel %vm526, %v950, 0
  %v993 = vsel %vm526, %v951, 0
  %v996 = vsel %vm526, %v952, 0
  %v999 = vsel %vm526, %v953, 0
  %v1002 = vsel %vm526, %v954, 0
  %v1005 = vsel %vm526, %v955, 0
  %v1008 = vsel %vm526, %v956, 0
  %v1011 = vsel %vm526, %v957, 0
  %v1014 = vsel %vm526, %v958, 0
  %v1017 = vsel %vm526, %v959, 0
  %1019 = vmatprep.subr.mxu0 0.0
  %1020 = vmatpush1.msra.mxu0 %v960
  %1021 = vmatprep.subr.mxu0 0.0
  %1022 = vmatpush1.msra.mxu0 %v961
  %1023 = vmatprep.subr.mxu0 0.0
  %1024 = vmatpush1.msra.mxu0 %v962
  %1025 = vmatprep.subr.mxu0 0.0
  %1026 = vmatpush1.msra.mxu0 %v963
  %1027 = vmatprep.subr.mxu0 0.0
  %1028 = vmatpush1.msra.mxu0 0.0
  %1029 = vmatprep.subr.mxu0 0.0
  %1030 = vmatpush1.msra.mxu0 0.0
  %1031 = vmatprep.subr.mxu0 0.0
  %1032 = vmatpush1.msra.mxu0 0.0
  %1033 = vmatprep.subr.mxu0 0.0
  %1034 = vmatpush1.msra.mxu0 0.0
  %1035 = vmatprep.subr.mxu0 0.0
  %1036 = vmatpush1.msra.mxu0 0.0
  %1037 = vmatprep.subr.mxu0 0.0
  %1038 = vmatpush1.msra.mxu0 0.0
  %1039 = vmatprep.subr.mxu0 0.0
  %1040 = vmatpush1.msra.mxu0 0.0
  %1041 = vmatprep.subr.mxu0 0.0
  %1042 = vmatpush1.msra.mxu0 0.0
  %1043 = vmatprep.subr.mxu0 0.0
  %1044 = vmatpush1.msra.mxu0 0.0
  %1045 = vmatprep.subr.mxu0 0.0
  %1046 = vmatpush1.msra.mxu0 0.0
  %1047 = vmatprep.subr.mxu0 0.0
  %1048 = vmatpush1.msra.mxu0 0.0
  %1049 = vmatprep.subr.mxu0 0.0
  %1050 = vmatpush1.msra.mxu0 0.0
  %1051 = vmatprep.subr.mxu0 0.0
  %1052 = vmatpush1.msra.mxu0 0.0
  %1053 = vmatprep.subr.mxu0 0.0
  %1054 = vmatpush1.msra.mxu0 0.0
  %1055 = vmatprep.subr.mxu0 0.0
  %1056 = vmatpush1.msra.mxu0 0.0
  %1057 = vmatprep.subr.mxu0 0.0
  %1058 = vmatpush1.msra.mxu0 0.0
  %1059 = vmatprep.subr.mxu0 0.0
  %1060 = vmatpush1.msra.mxu0 0.0
  %1061 = vmatprep.subr.mxu0 0.0
  %1062 = vmatpush1.msra.mxu0 0.0
  %1063 = vmatprep.subr.mxu0 0.0
  %1064 = vmatpush1.msra.mxu0 0.0
  %1065 = vmatprep.subr.mxu0 0.0
  %1066 = vmatpush1.msra.mxu0 0.0
  %1067 = vmatprep.subr.mxu0 0.0
  %1068 = vmatpush1.msra.mxu0 0.0
  %1069 = vmatprep.subr.mxu0 0.0
  %1070 = vmatpush1.msra.mxu0 0.0
  %1071 = vmatprep.subr.mxu0 0.0
  %1072 = vmatpush1.msra.mxu0 0.0
  %1073 = vmatprep.subr.mxu0 0.0
  %1074 = vmatpush1.msra.mxu0 0.0
  %1075 = vmatprep.subr.mxu0 0.0
  %1076 = vmatpush1.msra.mxu0 0.0
  %1077 = vmatprep.subr.mxu0 0.0
  %1078 = vmatpush1.msra.mxu0 0.0
  %1079 = vmatprep.subr.mxu0 0.0
  %1080 = vmatpush1.msra.mxu0 0.0
  %1081 = vmatprep.subr.mxu0 0.0
  %1082 = vmatpush1.msra.mxu0 0.0
  %1083 = vmatprep.mubr.f32.mxu0 0.0
  %1084 = vmatmul.mubr.f32.gmra.mrb[0].mxu0 %v972
  %v1085 = vpop.f32.mrb[0].mxu0
  %v1086 = vadd.f32 %v969, %v1085
  %v1087 = vpop.f32.mrb[0].mxu0
  %1088 = vmatprep.mubr.f32.mxu0 0.0
  %1089 = vmatmul.mubr.f32.gmra.mrb[0].mxu0 %v975
  %v1090 = vpop.f32.mrb[0].mxu0
  %v1091 = vadd.f32 %v969, %v1090
  %v1092 = vpop.f32.mrb[0].mxu0
  %1093 = vmatprep.mubr.f32.mxu0 0.0
  %1094 = vmatmul.mubr.f32.gmra.mrb[0].mxu0 %v978
  %v1095 = vpop.f32.mrb[0].mxu0
  %v1096 = vadd.f32 %v969, %v1095
  %v1097 = vpop.f32.mrb[0].mxu0
  %1098 = vmatprep.mubr.f32.mxu0 0.0
  %1099 = vmatmul.mubr.f32.gmra.mrb[0].mxu0 %v981
  %v1100 = vpop.f32.mrb[0].mxu0
  %v1101 = vadd.f32 %v969, %v1100
  %v1102 = vpop.f32.mrb[0].mxu0
  %1103 = vmatprep.mubr.f32.mxu0 0.0
  %1104 = vmatmul.mubr.f32.gmra.mrb[0].mxu0 %v984
  %v1105 = vpop.f32.mrb[0].mxu0
  %v1106 = vadd.f32 %v969, %v1105
  %v1107 = vpop.f32.mrb[0].mxu0
  %1108 = vmatprep.mubr.f32.mxu0 0.0
  %1109 = vmatmul.mubr.f32.gmra.mrb[0].mxu0 %v987
  %v1110 = vpop.f32.mrb[0].mxu0
  %v1111 = vadd.f32 %v969, %v1110
  %v1112 = vpop.f32.mrb[0].mxu0
  %1113 = vmatprep.mubr.f32.mxu0 0.0
  %1114 = vmatmul.mubr.f32.gmra.mrb[0].mxu0 %v990
  %v1115 = vpop.f32.mrb[0].mxu0
  %v1116 = vadd.f32 %v969, %v1115
  %v1117 = vpop.f32.mrb[0].mxu0
  %1118 = vmatprep.mubr.f32.mxu0 0.0
  %1119 = vmatmul.mubr.f32.gmra.mrb[0].mxu0 %v993
  %v1120 = vpop.f32.mrb[0].mxu0
  %v1121 = vadd.f32 %v969, %v1120
  %v1122 = vpop.f32.mrb[0].mxu0
  %1123 = vmatprep.mubr.f32.mxu0 0.0
  %1124 = vmatmul.mubr.f32.gmra.mrb[0].mxu0 %v996
  %v1125 = vpop.f32.mrb[0].mxu0
  %v1126 = vadd.f32 %v969, %v1125
  %v1127 = vpop.f32.mrb[0].mxu0
  %1128 = vmatprep.mubr.f32.mxu0 0.0
  %1129 = vmatmul.mubr.f32.gmra.mrb[0].mxu0 %v999
  %v1130 = vpop.f32.mrb[0].mxu0
  %v1131 = vadd.f32 %v969, %v1130
  %v1132 = vpop.f32.mrb[0].mxu0
  %1133 = vmatprep.mubr.f32.mxu0 0.0
  %1134 = vmatmul.mubr.f32.gmra.mrb[0].mxu0 %v1002
  %v1135 = vpop.f32.mrb[0].mxu0
  %v1136 = vadd.f32 %v969, %v1135
  %v1137 = vpop.f32.mrb[0].mxu0
  %1138 = vmatprep.mubr.f32.mxu0 0.0
  %1139 = vmatmul.mubr.f32.gmra.mrb[0].mxu0 %v1005
  %v1140 = vpop.f32.mrb[0].mxu0
  %v1141 = vadd.f32 %v969, %v1140
  %v1142 = vpop.f32.mrb[0].mxu0
  %1143 = vmatprep.mubr.f32.mxu0 0.0
  %1144 = vmatmul.mubr.f32.gmra.mrb[0].mxu0 %v1008
  %v1145 = vpop.f32.mrb[0].mxu0
  %v1146 = vadd.f32 %v969, %v1145
  %v1147 = vpop.f32.mrb[0].mxu0
  %1148 = vmatprep.mubr.f32.mxu0 0.0
  %1149 = vmatmul.mubr.f32.gmra.mrb[0].mxu0 %v1011
  %v1150 = vpop.f32.mrb[0].mxu0
  %v1151 = vadd.f32 %v969, %v1150
  %v1152 = vpop.f32.mrb[0].mxu0
  %1153 = vmatprep.mubr.f32.mxu0 0.0
  %1154 = vmatmul.mubr.f32.gmra.mrb[0].mxu0 %v1014
  %v1155 = vpop.f32.mrb[0].mxu0
  %v1156 = vadd.f32 %v969, %v1155
  %v1157 = vpop.f32.mrb[0].mxu0
  %1158 = vmatprep.mubr.f32.mxu0 0.0
  %1159 = vmatmul.mubr.f32.gmra.mrb[0].mxu0 %v1017
  %v1160 = vpop.f32.mrb[0].mxu0
  %v1161 = vadd.f32 %v969, %v1160
  %v1162 = vpop.f32.mrb[0].mxu0
  %1163 = vdwg.mxu0
  %v1164 = vmul.f32 %v1086, 0.5
  %v1165 = vmul.f32 %v1091, 0.5
  %v1166 = vmul.f32 %v1096, 0.5
  %v1167 = vmul.f32 %v1101, 0.5
  %v1168 = vmul.f32 %v1106, 0.5
  %v1169 = vmul.f32 %v1111, 0.5
  %v1170 = vmul.f32 %v1116, 0.5
  %v1171 = vmul.f32 %v1121, 0.5
  %v1172 = vmul.f32 %v1126, 0.5
  %v1173 = vmul.f32 %v1131, 0.5
  %v1174 = vmul.f32 %v1136, 0.5
  %v1175 = vmul.f32 %v1141, 0.5
  %v1176 = vmul.f32 %v1146, 0.5
  %v1177 = vmul.f32 %v1151, 0.5
  %v1178 = vmul.f32 %v1156, 0.5
  %v1179 = vmul.f32 %v1161, 0.5
  %v1180 = vmul.f32 %v1164, 1.442695
  %v1181 = vpow.pop %v1180
  %v1182 = vmul.f32 %v1165, 1.442695
  %v1183 = vpow.pop %v1182
  %v1184 = vmul.f32 %v1166, 1.442695
  %v1185 = vpow.pop %v1184
  %v1186 = vmul.f32 %v1167, 1.442695
  %v1187 = vpow.pop %v1186
  %v1188 = vmul.f32 %v1168, 1.442695
  %v1189 = vpow.pop %v1188
  %v1190 = vmul.f32 %v1169, 1.442695
  %v1191 = vpow.pop %v1190
  %v1192 = vmul.f32 %v1170, 1.442695
  %v1193 = vpow.pop %v1192
  %v1194 = vmul.f32 %v1171, 1.442695
  %v1195 = vpow.pop %v1194
  %v1196 = vmul.f32 %v1172, 1.442695
  %v1197 = vpow.pop %v1196
  %v1198 = vmul.f32 %v1173, 1.442695
  %v1199 = vpow.pop %v1198
  %v1200 = vmul.f32 %v1174, 1.442695
  %v1201 = vpow.pop %v1200
  %v1202 = vmul.f32 %v1175, 1.442695
  %v1203 = vpow.pop %v1202
  %v1204 = vmul.f32 %v1176, 1.442695
  %v1205 = vpow.pop %v1204
  %v1206 = vmul.f32 %v1177, 1.442695
  %v1207 = vpow.pop %v1206
  %v1208 = vmul.f32 %v1178, 1.442695
  %v1209 = vpow.pop %v1208
  %v1210 = vmul.f32 %v1179, 1.442695
  %v1211 = vpow.pop %v1210
  %v1212 = vld [vmem:[%s1] sm:$0x1]
  %v1214 = vlaneseq
  %v1215 = vshrl.u32 %v1214, 7
  %v1216 = vsub.s32 0, %v1215
  %v1217 = vrot.slane %v1212, %v1216
  %1218 = vrot.lane.b32.xlu0 %v1217, 16
  %v1219 = vpop.permute.xlu0 %1218
  %v1221 = vmul.f32 %v1181, %v1219
  %v1222 = vmul.f32 %v1183, %v1219
  %v1223 = vmul.f32 %v1185, %v1219
  %v1224 = vmul.f32 %v1187, %v1219
  %v1225 = vmul.f32 %v1189, %v1219
  %v1226 = vmul.f32 %v1191, %v1219
  %v1227 = vmul.f32 %v1193, %v1219
  %v1228 = vmul.f32 %v1195, %v1219
  %v1229 = vmul.f32 %v1197, %v1219
  %v1230 = vmul.f32 %v1199, %v1219
  %v1231 = vmul.f32 %v1201, %v1219
  %v1232 = vmul.f32 %v1203, %v1219
  %v1233 = vmul.f32 %v1205, %v1219
  %v1234 = vmul.f32 %v1207, %v1219
  %v1235 = vmul.f32 %v1209, %v1219
  %v1236 = vmul.f32 %v1211, %v1219
  %1253 = vrot.lane.b32.xlu0 %v1221, 112
  %v1254 = vpop.permute.xlu0 %1253
  %1255 = vrot.lane.b32.xlu0 %v1222, 112
  %v1256 = vpop.permute.xlu0 %1255
  %1257 = vrot.lane.b32.xlu0 %v1223, 112
  %v1258 = vpop.permute.xlu0 %1257
  %1259 = vrot.lane.b32.xlu0 %v1224, 112
  %v1260 = vpop.permute.xlu0 %1259
  %1261 = vrot.lane.b32.xlu0 %v1225, 112
  %v1262 = vpop.permute.xlu0 %1261
  %1263 = vrot.lane.b32.xlu0 %v1226, 112
  %v1264 = vpop.permute.xlu0 %1263
  %1265 = vrot.lane.b32.xlu0 %v1227, 112
  %v1266 = vpop.permute.xlu0 %1265
  %1267 = vrot.lane.b32.xlu0 %v1228, 112
  %v1268 = vpop.permute.xlu0 %1267
  %1269 = vrot.lane.b32.xlu0 %v1229, 112
  %v1270 = vpop.permute.xlu0 %1269
  %1271 = vrot.lane.b32.xlu0 %v1230, 112
  %v1272 = vpop.permute.xlu0 %1271
  %1273 = vrot.lane.b32.xlu0 %v1231, 112
  %v1274 = vpop.permute.xlu0 %1273
  %1275 = vrot.lane.b32.xlu0 %v1232, 112
  %v1276 = vpop.permute.xlu0 %1275
  %1277 = vrot.lane.b32.xlu0 %v1233, 112
  %v1278 = vpop.permute.xlu0 %1277
  %1279 = vrot.lane.b32.xlu0 %v1234, 112
  %v1280 = vpop.permute.xlu0 %1279
  %1281 = vrot.lane.b32.xlu0 %v1235, 112
  %v1282 = vpop.permute.xlu0 %1281
  %1283 = vrot.lane.b32.xlu0 %v1236, 112
  %v1284 = vpop.permute.xlu0 %1283
  %v1301 = vadd.f32 %v1086, %v1254
  %v1302 = vadd.f32 %v1091, %v1256
  %v1303 = vadd.f32 %v1096, %v1258
  %v1304 = vadd.f32 %v1101, %v1260
  %v1305 = vadd.f32 %v1106, %v1262
  %v1306 = vadd.f32 %v1111, %v1264
  %v1307 = vadd.f32 %v1116, %v1266
  %v1308 = vadd.f32 %v1121, %v1268
  %v1309 = vadd.f32 %v1126, %v1270
  %v1310 = vadd.f32 %v1131, %v1272
  %v1311 = vadd.f32 %v1136, %v1274
  %v1312 = vadd.f32 %v1141, %v1276
  %v1313 = vadd.f32 %v1146, %v1278
  %v1314 = vadd.f32 %v1151, %v1280
  %v1315 = vadd.f32 %v1156, %v1282
  %v1316 = vadd.f32 %v1161, %v1284
  %vm1317 = vcmask 130048
  %v1318 = vsel %vm1317, %v1301, -inf
  %1319 = vmax.xlane.f32.xlu0 %v1318
  %v1320 = vpop.xlane.xlu0 %1319
  %v1321 = vsel %vm1317, %v1302, -inf
  %1322 = vmax.xlane.f32.xlu0 %v1321
  %v1323 = vpop.xlane.xlu0 %1322
  %v1324 = vsel %vm1317, %v1303, -inf
  %1325 = vmax.xlane.f32.xlu0 %v1324
  %v1326 = vpop.xlane.xlu0 %1325
  %v1327 = vsel %vm1317, %v1304, -inf
  %1328 = vmax.xlane.f32.xlu0 %v1327
  %v1329 = vpop.xlane.xlu0 %1328
  %v1330 = vsel %vm1317, %v1305, -inf
  %1331 = vmax.xlane.f32.xlu0 %v1330
  %v1332 = vpop.xlane.xlu0 %1331
  %v1333 = vsel %vm1317, %v1306, -inf
  %1334 = vmax.xlane.f32.xlu0 %v1333
  %v1335 = vpop.xlane.xlu0 %1334
  %v1336 = vsel %vm1317, %v1307, -inf
  %1337 = vmax.xlane.f32.xlu0 %v1336
  %v1338 = vpop.xlane.xlu0 %1337
  %v1339 = vsel %vm1317, %v1308, -inf
  %1340 = vmax.xlane.f32.xlu0 %v1339
  %v1341 = vpop.xlane.xlu0 %1340
  %v1342 = vsel %vm1317, %v1309, -inf
  %1343 = vmax.xlane.f32.xlu0 %v1342
  %v1344 = vpop.xlane.xlu0 %1343
  %v1345 = vsel %vm1317, %v1310, -inf
  %1346 = vmax.xlane.f32.xlu0 %v1345
  %v1347 = vpop.xlane.xlu0 %1346
  %v1348 = vsel %vm1317, %v1311, -inf
  %1349 = vmax.xlane.f32.xlu0 %v1348
  %v1350 = vpop.xlane.xlu0 %1349
  %v1351 = vsel %vm1317, %v1312, -inf
  %1352 = vmax.xlane.f32.xlu0 %v1351
  %v1353 = vpop.xlane.xlu0 %1352
  %v1354 = vsel %vm1317, %v1313, -inf
  %1355 = vmax.xlane.f32.xlu0 %v1354
  %v1356 = vpop.xlane.xlu0 %1355
  %v1357 = vsel %vm1317, %v1314, -inf
  %1358 = vmax.xlane.f32.xlu0 %v1357
  %v1359 = vpop.xlane.xlu0 %1358
  %v1360 = vsel %vm1317, %v1315, -inf
  %1361 = vmax.xlane.f32.xlu0 %v1360
  %v1362 = vpop.xlane.xlu0 %1361
  %v1363 = vsel %vm1317, %v1316, -inf
  %1364 = vmax.xlane.f32.xlu0 %v1363
  %v1365 = vpop.xlane.xlu0 %1364
  %v1366 = vsub.f32 %v1301, %v1320
  %v1367 = vsub.f32 %v1302, %v1323
  %v1368 = vsub.f32 %v1303, %v1326
  %v1369 = vsub.f32 %v1304, %v1329
  %v1370 = vsub.f32 %v1305, %v1332
  %v1371 = vsub.f32 %v1306, %v1335
  %v1372 = vsub.f32 %v1307, %v1338
  %v1373 = vsub.f32 %v1308, %v1341
  %v1374 = vsub.f32 %v1309, %v1344
  %v1375 = vsub.f32 %v1310, %v1347
  %v1376 = vsub.f32 %v1311, %v1350
  %v1377 = vsub.f32 %v1312, %v1353
  %v1378 = vsub.f32 %v1313, %v1356
  %v1379 = vsub.f32 %v1314, %v1359
  %v1380 = vsub.f32 %v1315, %v1362
  %v1381 = vsub.f32 %v1316, %v1365
  %v1382 = vmul.f32 %v1366, 1.442695
  %v1383 = vpow.pop %v1382
  %v1384 = vmul.f32 %v1367, 1.442695
  %v1385 = vpow.pop %v1384
  %v1386 = vmul.f32 %v1368, 1.442695
  %v1387 = vpow.pop %v1386
  %v1388 = vmul.f32 %v1369, 1.442695
  %v1389 = vpow.pop %v1388
  %v1390 = vmul.f32 %v1370, 1.442695
  %v1391 = vpow.pop %v1390
  %v1392 = vmul.f32 %v1371, 1.442695
  %v1393 = vpow.pop %v1392
  %v1394 = vmul.f32 %v1372, 1.442695
  %v1395 = vpow.pop %v1394
  %v1396 = vmul.f32 %v1373, 1.442695
  %v1397 = vpow.pop %v1396
  %v1398 = vmul.f32 %v1374, 1.442695
  %v1399 = vpow.pop %v1398
  %v1400 = vmul.f32 %v1375, 1.442695
  %v1401 = vpow.pop %v1400
  %v1402 = vmul.f32 %v1376, 1.442695
  %v1403 = vpow.pop %v1402
  %v1404 = vmul.f32 %v1377, 1.442695
  %v1405 = vpow.pop %v1404
  %v1406 = vmul.f32 %v1378, 1.442695
  %v1407 = vpow.pop %v1406
  %v1408 = vmul.f32 %v1379, 1.442695
  %v1409 = vpow.pop %v1408
  %v1410 = vmul.f32 %v1380, 1.442695
  %v1411 = vpow.pop %v1410
  %v1412 = vmul.f32 %v1381, 1.442695
  %v1413 = vpow.pop %v1412
  %v1414 = vsel %vm1317, %v1383, 0.0
  %1415 = vadd.xlane.f32.xlu0 %v1414
  %v1416 = vpop.xlane.xlu0 %1415
  %v1417 = vsel %vm1317, %v1385, 0.0
  %1418 = vadd.xlane.f32.xlu0 %v1417
  %v1419 = vpop.xlane.xlu0 %1418
  %v1420 = vsel %vm1317, %v1387, 0.0
  %1421 = vadd.xlane.f32.xlu0 %v1420
  %v1422 = vpop.xlane.xlu0 %1421
  %v1423 = vsel %vm1317, %v1389, 0.0
  %1424 = vadd.xlane.f32.xlu0 %v1423
  %v1425 = vpop.xlane.xlu0 %1424
  %v1426 = vsel %vm1317, %v1391, 0.0
  %1427 = vadd.xlane.f32.xlu0 %v1426
  %v1428 = vpop.xlane.xlu0 %1427
  %v1429 = vsel %vm1317, %v1393, 0.0
  %1430 = vadd.xlane.f32.xlu0 %v1429
  %v1431 = vpop.xlane.xlu0 %1430
  %v1432 = vsel %vm1317, %v1395, 0.0
  %1433 = vadd.xlane.f32.xlu0 %v1432
  %v1434 = vpop.xlane.xlu0 %1433
  %v1435 = vsel %vm1317, %v1397, 0.0
  %1436 = vadd.xlane.f32.xlu0 %v1435
  %v1437 = vpop.xlane.xlu0 %1436
  %v1438 = vsel %vm1317, %v1399, 0.0
  %1439 = vadd.xlane.f32.xlu0 %v1438
  %v1440 = vpop.xlane.xlu0 %1439
  %v1441 = vsel %vm1317, %v1401, 0.0
  %1442 = vadd.xlane.f32.xlu0 %v1441
  %v1443 = vpop.xlane.xlu0 %1442
  %v1444 = vsel %vm1317, %v1403, 0.0
  %1445 = vadd.xlane.f32.xlu0 %v1444
  %v1446 = vpop.xlane.xlu0 %1445
  %v1447 = vsel %vm1317, %v1405, 0.0
  %1448 = vadd.xlane.f32.xlu0 %v1447
  %v1449 = vpop.xlane.xlu0 %1448
  %v1450 = vsel %vm1317, %v1407, 0.0
  %1451 = vadd.xlane.f32.xlu0 %v1450
  %v1452 = vpop.xlane.xlu0 %1451
  %v1453 = vsel %vm1317, %v1409, 0.0
  %1454 = vadd.xlane.f32.xlu0 %v1453
  %v1455 = vpop.xlane.xlu0 %1454
  %v1456 = vsel %vm1317, %v1411, 0.0
  %1457 = vadd.xlane.f32.xlu0 %v1456
  %v1458 = vpop.xlane.xlu0 %1457
  %v1459 = vsel %vm1317, %v1413, 0.0
  %1460 = vadd.xlane.f32.xlu0 %v1459
  %v1461 = vpop.xlane.xlu0 %1460
  %v1462 = vrcp.pop %v1416
  %v1463 = vrcp.pop %v1419
  %v1464 = vrcp.pop %v1422
  %v1465 = vrcp.pop %v1425
  %v1466 = vrcp.pop %v1428
  %v1467 = vrcp.pop %v1431
  %v1468 = vrcp.pop %v1434
  %v1469 = vrcp.pop %v1437
  %v1470 = vrcp.pop %v1440
  %v1471 = vrcp.pop %v1443
  %v1472 = vrcp.pop %v1446
  %v1473 = vrcp.pop %v1449
  %v1474 = vrcp.pop %v1452
  %v1475 = vrcp.pop %v1455
  %v1476 = vrcp.pop %v1458
  %v1477 = vrcp.pop %v1461
  %v1478 = vmul.f32 %v1383, %v1462
  %v1479 = vmul.f32 %v1385, %v1463
  %v1480 = vmul.f32 %v1387, %v1464
  %v1481 = vmul.f32 %v1389, %v1465
  %v1482 = vmul.f32 %v1391, %v1466
  %v1483 = vmul.f32 %v1393, %v1467
  %v1484 = vmul.f32 %v1395, %v1468
  %v1485 = vmul.f32 %v1397, %v1469
  %v1486 = vmul.f32 %v1399, %v1470
  %v1487 = vmul.f32 %v1401, %v1471
  %v1488 = vmul.f32 %v1403, %v1472
  %v1489 = vmul.f32 %v1405, %v1473
  %v1490 = vmul.f32 %v1407, %v1474
  %v1491 = vmul.f32 %v1409, %v1475
  %v1492 = vmul.f32 %v1411, %v1476
  %v1493 = vmul.f32 %v1413, %v1477
  %v1494 = vld [vmem:[%s2] sm:$0xff]
  %v1495 = vld [vmem:[%s2 + $0x8] sm:$0xff]
  %v1496 = vld [vmem:[%s2 + $0x10] sm:$0xff]
  %v1497 = vld [vmem:[%s2 + $0x18] sm:$0xff]
  %v1498 = vld [vmem:[%s2 + $0x20] sm:$0xff]
  %v1499 = vld [vmem:[%s2 + $0x28] sm:$0xff]
  %v1500 = vld [vmem:[%s2 + $0x30] sm:$0xff]
  %v1501 = vld [vmem:[%s2 + $0x38] sm:$0xff]
  %v1502 = vld [vmem:[%s2 + $0x40] sm:$0xff]
  %v1503 = vld [vmem:[%s2 + $0x48] sm:$0xff]
  %v1504 = vld [vmem:[%s2 + $0x50] sm:$0xff]
  %v1505 = vld [vmem:[%s2 + $0x58] sm:$0xff]
  %v1506 = vld [vmem:[%s2 + $0x60] sm:$0xff]
  %v1507 = vld [vmem:[%s2 + $0x68] sm:$0xff]
  %v1508 = vld [vmem:[%s2 + $0x70] sm:$0xff]
  %v1509 = vld [vmem:[%s2 + $0x78] sm:$0xff]
  %v1510 = vmul.f32 %v1478, %v1494
  %v1511 = vmul.f32 %v1479, %v1495
  %v1512 = vmul.f32 %v1480, %v1496
  %v1513 = vmul.f32 %v1481, %v1497
  %v1514 = vmul.f32 %v1482, %v1498
  %v1515 = vmul.f32 %v1483, %v1499
  %v1516 = vmul.f32 %v1484, %v1500
  %v1517 = vmul.f32 %v1485, %v1501
  %v1518 = vmul.f32 %v1486, %v1502
  %v1519 = vmul.f32 %v1487, %v1503
  %v1520 = vmul.f32 %v1488, %v1504
  %v1521 = vmul.f32 %v1489, %v1505
  %v1522 = vmul.f32 %v1490, %v1506
  %v1523 = vmul.f32 %v1491, %v1507
  %v1524 = vmul.f32 %v1492, %v1508
  %v1525 = vmul.f32 %v1493, %v1509
  %v1526 = vld [vmem:[%s9] sm:$0xff]
  %v1527 = vld [vmem:[%s9 + $0x8] sm:$0xff]
  %v1528 = vld [vmem:[%s10] sm:$0x1]
  %v1530 = vlaneseq
  %v1531 = vshrl.u32 %v1530, 7
  %v1532 = vsub.s32 0, %v1531
  %v1533 = vrot.slane %v1528, %v1532
  %v1536 = vsel %vm1317, %v1510, 0
  %v1539 = vsel %vm1317, %v1511, 0
  %v1542 = vsel %vm1317, %v1512, 0
  %v1545 = vsel %vm1317, %v1513, 0
  %v1548 = vsel %vm1317, %v1514, 0
  %v1551 = vsel %vm1317, %v1515, 0
  %v1554 = vsel %vm1317, %v1516, 0
  %v1557 = vsel %vm1317, %v1517, 0
  %v1560 = vsel %vm1317, %v1518, 0
  %v1563 = vsel %vm1317, %v1519, 0
  %v1566 = vsel %vm1317, %v1520, 0
  %v1569 = vsel %vm1317, %v1521, 0
  %v1572 = vsel %vm1317, %v1522, 0
  %v1575 = vsel %vm1317, %v1523, 0
  %v1578 = vsel %vm1317, %v1524, 0
  %v1581 = vsel %vm1317, %v1525, 0
  %1583 = vmatprep.subr.mxu0 0.0
  %1584 = vmatpush1.msra.mxu0 %v1526
  %1585 = vmatprep.subr.mxu0 0.0
  %1586 = vmatpush1.msra.mxu0 %v1527
  %1587 = vmatprep.subr.mxu0 0.0
  %1588 = vmatpush1.msra.mxu0 0.0
  %1589 = vmatprep.subr.mxu0 0.0
  %1590 = vmatpush1.msra.mxu0 0.0
  %1591 = vmatprep.subr.mxu0 0.0
  %1592 = vmatpush1.msra.mxu0 0.0
  %1593 = vmatprep.subr.mxu0 0.0
  %1594 = vmatpush1.msra.mxu0 0.0
  %1595 = vmatprep.subr.mxu0 0.0
  %1596 = vmatpush1.msra.mxu0 0.0
  %1597 = vmatprep.subr.mxu0 0.0
  %1598 = vmatpush1.msra.mxu0 0.0
  %1599 = vmatprep.subr.mxu0 0.0
  %1600 = vmatpush1.msra.mxu0 0.0
  %1601 = vmatprep.subr.mxu0 0.0
  %1602 = vmatpush1.msra.mxu0 0.0
  %1603 = vmatprep.subr.mxu0 0.0
  %1604 = vmatpush1.msra.mxu0 0.0
  %1605 = vmatprep.subr.mxu0 0.0
  %1606 = vmatpush1.msra.mxu0 0.0
  %1607 = vmatprep.subr.mxu0 0.0
  %1608 = vmatpush1.msra.mxu0 0.0
  %1609 = vmatprep.subr.mxu0 0.0
  %1610 = vmatpush1.msra.mxu0 0.0
  %1611 = vmatprep.subr.mxu0 0.0
  %1612 = vmatpush1.msra.mxu0 0.0
  %1613 = vmatprep.subr.mxu0 0.0
  %1614 = vmatpush1.msra.mxu0 0.0
  %1615 = vmatprep.subr.mxu0 0.0
  %1616 = vmatpush1.msra.mxu0 0.0
  %1617 = vmatprep.subr.mxu0 0.0
  %1618 = vmatpush1.msra.mxu0 0.0
  %1619 = vmatprep.subr.mxu0 0.0
  %1620 = vmatpush1.msra.mxu0 0.0
  %1621 = vmatprep.subr.mxu0 0.0
  %1622 = vmatpush1.msra.mxu0 0.0
  %1623 = vmatprep.subr.mxu0 0.0
  %1624 = vmatpush1.msra.mxu0 0.0
  %1625 = vmatprep.subr.mxu0 0.0
  %1626 = vmatpush1.msra.mxu0 0.0
  %1627 = vmatprep.subr.mxu0 0.0
  %1628 = vmatpush1.msra.mxu0 0.0
  %1629 = vmatprep.subr.mxu0 0.0
  %1630 = vmatpush1.msra.mxu0 0.0
  %1631 = vmatprep.subr.mxu0 0.0
  %1632 = vmatpush1.msra.mxu0 0.0
  %1633 = vmatprep.subr.mxu0 0.0
  %1634 = vmatpush1.msra.mxu0 0.0
  %1635 = vmatprep.subr.mxu0 0.0
  %1636 = vmatpush1.msra.mxu0 0.0
  %1637 = vmatprep.subr.mxu0 0.0
  %1638 = vmatpush1.msra.mxu0 0.0
  %1639 = vmatprep.subr.mxu0 0.0
  %1640 = vmatpush1.msra.mxu0 0.0
  %1641 = vmatprep.subr.mxu0 0.0
  %1642 = vmatpush1.msra.mxu0 0.0
  %1643 = vmatprep.subr.mxu0 0.0
  %1644 = vmatpush1.msra.mxu0 0.0
  %1645 = vmatprep.subr.mxu0 0.0
  %1646 = vmatpush1.msra.mxu0 0.0
  %1647 = vmatprep.mubr.f32.mxu0 0.0
  %1648 = vmatmul.mubr.f32.gmra.mrb[0].mxu0 %v1536
  %v1649 = vpop.f32.mrb[0].mxu0
  %v1650 = vadd.f32 %v1533, %v1649
  %v1651 = vpop.f32.mrb[0].mxu0
  %1652 = vmatprep.mubr.f32.mxu0 0.0
  %1653 = vmatmul.mubr.f32.gmra.mrb[0].mxu0 %v1539
  %v1654 = vpop.f32.mrb[0].mxu0
  %v1655 = vadd.f32 %v1533, %v1654
  %v1656 = vpop.f32.mrb[0].mxu0
  %1657 = vmatprep.mubr.f32.mxu0 0.0
  %1658 = vmatmul.mubr.f32.gmra.mrb[0].mxu0 %v1542
  %v1659 = vpop.f32.mrb[0].mxu0
  %v1660 = vadd.f32 %v1533, %v1659
  %v1661 = vpop.f32.mrb[0].mxu0
  %1662 = vmatprep.mubr.f32.mxu0 0.0
  %1663 = vmatmul.mubr.f32.gmra.mrb[0].mxu0 %v1545
  %v1664 = vpop.f32.mrb[0].mxu0
  %v1665 = vadd.f32 %v1533, %v1664
  %v1666 = vpop.f32.mrb[0].mxu0
  %1667 = vmatprep.mubr.f32.mxu0 0.0
  %1668 = vmatmul.mubr.f32.gmra.mrb[0].mxu0 %v1548
  %v1669 = vpop.f32.mrb[0].mxu0
  %v1670 = vadd.f32 %v1533, %v1669
  %v1671 = vpop.f32.mrb[0].mxu0
  %1672 = vmatprep.mubr.f32.mxu0 0.0
  %1673 = vmatmul.mubr.f32.gmra.mrb[0].mxu0 %v1551
  %v1674 = vpop.f32.mrb[0].mxu0
  %v1675 = vadd.f32 %v1533, %v1674
  %v1676 = vpop.f32.mrb[0].mxu0
  %1677 = vmatprep.mubr.f32.mxu0 0.0
  %1678 = vmatmul.mubr.f32.gmra.mrb[0].mxu0 %v1554
  %v1679 = vpop.f32.mrb[0].mxu0
  %v1680 = vadd.f32 %v1533, %v1679
  %v1681 = vpop.f32.mrb[0].mxu0
  %1682 = vmatprep.mubr.f32.mxu0 0.0
  %1683 = vmatmul.mubr.f32.gmra.mrb[0].mxu0 %v1557
  %v1684 = vpop.f32.mrb[0].mxu0
  %v1685 = vadd.f32 %v1533, %v1684
  %v1686 = vpop.f32.mrb[0].mxu0
  %1687 = vmatprep.mubr.f32.mxu0 0.0
  %1688 = vmatmul.mubr.f32.gmra.mrb[0].mxu0 %v1560
  %v1689 = vpop.f32.mrb[0].mxu0
  %v1690 = vadd.f32 %v1533, %v1689
  %v1691 = vpop.f32.mrb[0].mxu0
  %1692 = vmatprep.mubr.f32.mxu0 0.0
  %1693 = vmatmul.mubr.f32.gmra.mrb[0].mxu0 %v1563
  %v1694 = vpop.f32.mrb[0].mxu0
  %v1695 = vadd.f32 %v1533, %v1694
  %v1696 = vpop.f32.mrb[0].mxu0
  %1697 = vmatprep.mubr.f32.mxu0 0.0
  %1698 = vmatmul.mubr.f32.gmra.mrb[0].mxu0 %v1566
  %v1699 = vpop.f32.mrb[0].mxu0
  %v1700 = vadd.f32 %v1533, %v1699
  %v1701 = vpop.f32.mrb[0].mxu0
  %1702 = vmatprep.mubr.f32.mxu0 0.0
  %1703 = vmatmul.mubr.f32.gmra.mrb[0].mxu0 %v1569
  %v1704 = vpop.f32.mrb[0].mxu0
  %v1705 = vadd.f32 %v1533, %v1704
  %v1706 = vpop.f32.mrb[0].mxu0
  %1707 = vmatprep.mubr.f32.mxu0 0.0
  %1708 = vmatmul.mubr.f32.gmra.mrb[0].mxu0 %v1572
  %v1709 = vpop.f32.mrb[0].mxu0
  %v1710 = vadd.f32 %v1533, %v1709
  %v1711 = vpop.f32.mrb[0].mxu0
  %1712 = vmatprep.mubr.f32.mxu0 0.0
  %1713 = vmatmul.mubr.f32.gmra.mrb[0].mxu0 %v1575
  %v1714 = vpop.f32.mrb[0].mxu0
  %v1715 = vadd.f32 %v1533, %v1714
  %v1716 = vpop.f32.mrb[0].mxu0
  %1717 = vmatprep.mubr.f32.mxu0 0.0
  %1718 = vmatmul.mubr.f32.gmra.mrb[0].mxu0 %v1578
  %v1719 = vpop.f32.mrb[0].mxu0
  %v1720 = vadd.f32 %v1533, %v1719
  %v1721 = vpop.f32.mrb[0].mxu0
  %1722 = vmatprep.mubr.f32.mxu0 0.0
  %1723 = vmatmul.mubr.f32.gmra.mrb[0].mxu0 %v1581
  %v1724 = vpop.f32.mrb[0].mxu0
  %v1725 = vadd.f32 %v1533, %v1724
  %v1726 = vpop.f32.mrb[0].mxu0
  %1727 = vdwg.mxu0
  %v1728 = vld [vmem:[%s11] sm:$0xff]
  %v1729 = vld [vmem:[%s11 + $0x8] sm:$0xff]
  %v1730 = vld [vmem:[%s11 + $0x10] sm:$0xff]
  %v1731 = vld [vmem:[%s11 + $0x18] sm:$0xff]
  %v1732 = vld [vmem:[%s12] sm:$0x1]
  %v1734 = vlaneseq
  %v1735 = vshrl.u32 %v1734, 7
  %v1736 = vsub.s32 0, %v1735
  %v1737 = vrot.slane %v1732, %v1736
  %v1740 = vsel %vm526, %v1650, 0
  %v1743 = vsel %vm526, %v1655, 0
  %v1746 = vsel %vm526, %v1660, 0
  %v1749 = vsel %vm526, %v1665, 0
  %v1752 = vsel %vm526, %v1670, 0
  %v1755 = vsel %vm526, %v1675, 0
  %v1758 = vsel %vm526, %v1680, 0
  %v1761 = vsel %vm526, %v1685, 0
  %v1764 = vsel %vm526, %v1690, 0
  %v1767 = vsel %vm526, %v1695, 0
  %v1770 = vsel %vm526, %v1700, 0
  %v1773 = vsel %vm526, %v1705, 0
  %v1776 = vsel %vm526, %v1710, 0
  %v1779 = vsel %vm526, %v1715, 0
  %v1782 = vsel %vm526, %v1720, 0
  %v1785 = vsel %vm526, %v1725, 0
  %1787 = vmatprep.subr.mxu0 0.0
  %1788 = vmatpush1.msra.mxu0 %v1728
  %1789 = vmatprep.subr.mxu0 0.0
  %1790 = vmatpush1.msra.mxu0 %v1729
  %1791 = vmatprep.subr.mxu0 0.0
  %1792 = vmatpush1.msra.mxu0 %v1730
  %1793 = vmatprep.subr.mxu0 0.0
  %1794 = vmatpush1.msra.mxu0 %v1731
  %1795 = vmatprep.subr.mxu0 0.0
  %1796 = vmatpush1.msra.mxu0 0.0
  %1797 = vmatprep.subr.mxu0 0.0
  %1798 = vmatpush1.msra.mxu0 0.0
  %1799 = vmatprep.subr.mxu0 0.0
  %1800 = vmatpush1.msra.mxu0 0.0
  %1801 = vmatprep.subr.mxu0 0.0
  %1802 = vmatpush1.msra.mxu0 0.0
  %1803 = vmatprep.subr.mxu0 0.0
  %1804 = vmatpush1.msra.mxu0 0.0
  %1805 = vmatprep.subr.mxu0 0.0
  %1806 = vmatpush1.msra.mxu0 0.0
  %1807 = vmatprep.subr.mxu0 0.0
  %1808 = vmatpush1.msra.mxu0 0.0
  %1809 = vmatprep.subr.mxu0 0.0
  %1810 = vmatpush1.msra.mxu0 0.0
  %1811 = vmatprep.subr.mxu0 0.0
  %1812 = vmatpush1.msra.mxu0 0.0
  %1813 = vmatprep.subr.mxu0 0.0
  %1814 = vmatpush1.msra.mxu0 0.0
  %1815 = vmatprep.subr.mxu0 0.0
  %1816 = vmatpush1.msra.mxu0 0.0
  %1817 = vmatprep.subr.mxu0 0.0
  %1818 = vmatpush1.msra.mxu0 0.0
  %1819 = vmatprep.subr.mxu0 0.0
  %1820 = vmatpush1.msra.mxu0 0.0
  %1821 = vmatprep.subr.mxu0 0.0
  %1822 = vmatpush1.msra.mxu0 0.0
  %1823 = vmatprep.subr.mxu0 0.0
  %1824 = vmatpush1.msra.mxu0 0.0
  %1825 = vmatprep.subr.mxu0 0.0
  %1826 = vmatpush1.msra.mxu0 0.0
  %1827 = vmatprep.subr.mxu0 0.0
  %1828 = vmatpush1.msra.mxu0 0.0
  %1829 = vmatprep.subr.mxu0 0.0
  %1830 = vmatpush1.msra.mxu0 0.0
  %1831 = vmatprep.subr.mxu0 0.0
  %1832 = vmatpush1.msra.mxu0 0.0
  %1833 = vmatprep.subr.mxu0 0.0
  %1834 = vmatpush1.msra.mxu0 0.0
  %1835 = vmatprep.subr.mxu0 0.0
  %1836 = vmatpush1.msra.mxu0 0.0
  %1837 = vmatprep.subr.mxu0 0.0
  %1838 = vmatpush1.msra.mxu0 0.0
  %1839 = vmatprep.subr.mxu0 0.0
  %1840 = vmatpush1.msra.mxu0 0.0
  %1841 = vmatprep.subr.mxu0 0.0
  %1842 = vmatpush1.msra.mxu0 0.0
  %1843 = vmatprep.subr.mxu0 0.0
  %1844 = vmatpush1.msra.mxu0 0.0
  %1845 = vmatprep.subr.mxu0 0.0
  %1846 = vmatpush1.msra.mxu0 0.0
  %1847 = vmatprep.subr.mxu0 0.0
  %1848 = vmatpush1.msra.mxu0 0.0
  %1849 = vmatprep.subr.mxu0 0.0
  %1850 = vmatpush1.msra.mxu0 0.0
  %1851 = vmatprep.mubr.f32.mxu0 0.0
  %1852 = vmatmul.mubr.f32.gmra.mrb[0].mxu0 %v1740
  %v1853 = vpop.f32.mrb[0].mxu0
  %v1854 = vadd.f32 %v1737, %v1853
  %v1855 = vpop.f32.mrb[0].mxu0
  %1856 = vmatprep.mubr.f32.mxu0 0.0
  %1857 = vmatmul.mubr.f32.gmra.mrb[0].mxu0 %v1743
  %v1858 = vpop.f32.mrb[0].mxu0
  %v1859 = vadd.f32 %v1737, %v1858
  %v1860 = vpop.f32.mrb[0].mxu0
  %1861 = vmatprep.mubr.f32.mxu0 0.0
  %1862 = vmatmul.mubr.f32.gmra.mrb[0].mxu0 %v1746
  %v1863 = vpop.f32.mrb[0].mxu0
  %v1864 = vadd.f32 %v1737, %v1863
  %v1865 = vpop.f32.mrb[0].mxu0
  %1866 = vmatprep.mubr.f32.mxu0 0.0
  %1867 = vmatmul.mubr.f32.gmra.mrb[0].mxu0 %v1749
  %v1868 = vpop.f32.mrb[0].mxu0
  %v1869 = vadd.f32 %v1737, %v1868
  %v1870 = vpop.f32.mrb[0].mxu0
  %1871 = vmatprep.mubr.f32.mxu0 0.0
  %1872 = vmatmul.mubr.f32.gmra.mrb[0].mxu0 %v1752
  %v1873 = vpop.f32.mrb[0].mxu0
  %v1874 = vadd.f32 %v1737, %v1873
  %v1875 = vpop.f32.mrb[0].mxu0
  %1876 = vmatprep.mubr.f32.mxu0 0.0
  %1877 = vmatmul.mubr.f32.gmra.mrb[0].mxu0 %v1755
  %v1878 = vpop.f32.mrb[0].mxu0
  %v1879 = vadd.f32 %v1737, %v1878
  %v1880 = vpop.f32.mrb[0].mxu0
  %1881 = vmatprep.mubr.f32.mxu0 0.0
  %1882 = vmatmul.mubr.f32.gmra.mrb[0].mxu0 %v1758
  %v1883 = vpop.f32.mrb[0].mxu0
  %v1884 = vadd.f32 %v1737, %v1883
  %v1885 = vpop.f32.mrb[0].mxu0
  %1886 = vmatprep.mubr.f32.mxu0 0.0
  %1887 = vmatmul.mubr.f32.gmra.mrb[0].mxu0 %v1761
  %v1888 = vpop.f32.mrb[0].mxu0
  %v1889 = vadd.f32 %v1737, %v1888
  %v1890 = vpop.f32.mrb[0].mxu0
  %1891 = vmatprep.mubr.f32.mxu0 0.0
  %1892 = vmatmul.mubr.f32.gmra.mrb[0].mxu0 %v1764
  %v1893 = vpop.f32.mrb[0].mxu0
  %v1894 = vadd.f32 %v1737, %v1893
  %v1895 = vpop.f32.mrb[0].mxu0
  %1896 = vmatprep.mubr.f32.mxu0 0.0
  %1897 = vmatmul.mubr.f32.gmra.mrb[0].mxu0 %v1767
  %v1898 = vpop.f32.mrb[0].mxu0
  %v1899 = vadd.f32 %v1737, %v1898
  %v1900 = vpop.f32.mrb[0].mxu0
  %1901 = vmatprep.mubr.f32.mxu0 0.0
  %1902 = vmatmul.mubr.f32.gmra.mrb[0].mxu0 %v1770
  %v1903 = vpop.f32.mrb[0].mxu0
  %v1904 = vadd.f32 %v1737, %v1903
  %v1905 = vpop.f32.mrb[0].mxu0
  %1906 = vmatprep.mubr.f32.mxu0 0.0
  %1907 = vmatmul.mubr.f32.gmra.mrb[0].mxu0 %v1773
  %v1908 = vpop.f32.mrb[0].mxu0
  %v1909 = vadd.f32 %v1737, %v1908
  %v1910 = vpop.f32.mrb[0].mxu0
  %1911 = vmatprep.mubr.f32.mxu0 0.0
  %1912 = vmatmul.mubr.f32.gmra.mrb[0].mxu0 %v1776
  %v1913 = vpop.f32.mrb[0].mxu0
  %v1914 = vadd.f32 %v1737, %v1913
  %v1915 = vpop.f32.mrb[0].mxu0
  %1916 = vmatprep.mubr.f32.mxu0 0.0
  %1917 = vmatmul.mubr.f32.gmra.mrb[0].mxu0 %v1779
  %v1918 = vpop.f32.mrb[0].mxu0
  %v1919 = vadd.f32 %v1737, %v1918
  %v1920 = vpop.f32.mrb[0].mxu0
  %1921 = vmatprep.mubr.f32.mxu0 0.0
  %1922 = vmatmul.mubr.f32.gmra.mrb[0].mxu0 %v1782
  %v1923 = vpop.f32.mrb[0].mxu0
  %v1924 = vadd.f32 %v1737, %v1923
  %v1925 = vpop.f32.mrb[0].mxu0
  %1926 = vmatprep.mubr.f32.mxu0 0.0
  %1927 = vmatmul.mubr.f32.gmra.mrb[0].mxu0 %v1785
  %v1928 = vpop.f32.mrb[0].mxu0
  %v1929 = vadd.f32 %v1737, %v1928
  %v1930 = vpop.f32.mrb[0].mxu0
  %1931 = vdwg.mxu0
  %v1932 = vadd.f32 %v1854, %v1859
  %v1933 = vadd.f32 %v1932, %v1864
  %v1934 = vadd.f32 %v1933, %v1869
  %v1935 = vadd.f32 %v1934, %v1874
  %v1936 = vadd.f32 %v1935, %v1879
  %v1937 = vadd.f32 %v1936, %v1884
  %v1938 = vadd.f32 %v1937, %v1889
  %v1939 = vadd.f32 %v1938, %v1894
  %v1940 = vadd.f32 %v1939, %v1899
  %v1941 = vadd.f32 %v1940, %v1904
  %v1942 = vadd.f32 %v1941, %v1909
  %v1943 = vadd.f32 %v1942, %v1914
  %v1944 = vadd.f32 %v1943, %v1919
  %v1945 = vadd.f32 %v1944, %v1924
  %v1946 = vadd.f32 %v1945, %v1929
  %v1947 = vrot.slane %v1946, 4
  %v1948 = vadd.f32 %v1946, %v1947
  %v1949 = vrot.slane %v1948, 2
  %v1950 = vadd.f32 %v1948, %v1949
  %v1951 = vrot.slane %v1950, 1
  %v1952 = vadd.f32 %v1950, %v1951
  %v1953 = vrcp.pop 128.0
  %v1954 = vmul.f32 %v1952, %v1953
  %v1955 = vsub.f32 %v1854, %v1954
  %v1956 = vsub.f32 %v1859, %v1954
  %v1957 = vsub.f32 %v1864, %v1954
  %v1958 = vsub.f32 %v1869, %v1954
  %v1959 = vsub.f32 %v1874, %v1954
  %v1960 = vsub.f32 %v1879, %v1954
  %v1961 = vsub.f32 %v1884, %v1954
  %v1962 = vsub.f32 %v1889, %v1954
  %v1963 = vsub.f32 %v1894, %v1954
  %v1964 = vsub.f32 %v1899, %v1954
  %v1965 = vsub.f32 %v1904, %v1954
  %v1966 = vsub.f32 %v1909, %v1954
  %v1967 = vsub.f32 %v1914, %v1954
  %v1968 = vsub.f32 %v1919, %v1954
  %v1969 = vsub.f32 %v1924, %v1954
  %v1970 = vsub.f32 %v1929, %v1954
  %v1971 = vmul.f32 %v1955, %v1955
  %v1972 = vmul.f32 %v1956, %v1956
  %v1973 = vmul.f32 %v1957, %v1957
  %v1974 = vmul.f32 %v1958, %v1958
  %v1975 = vmul.f32 %v1959, %v1959
  %v1976 = vmul.f32 %v1960, %v1960
  %v1977 = vmul.f32 %v1961, %v1961
  %v1978 = vmul.f32 %v1962, %v1962
  %v1979 = vmul.f32 %v1963, %v1963
  %v1980 = vmul.f32 %v1964, %v1964
  %v1981 = vmul.f32 %v1965, %v1965
  %v1982 = vmul.f32 %v1966, %v1966
  %v1983 = vmul.f32 %v1967, %v1967
  %v1984 = vmul.f32 %v1968, %v1968
  %v1985 = vmul.f32 %v1969, %v1969
  %v1986 = vmul.f32 %v1970, %v1970
  %v1987 = vadd.f32 %v1971, %v1972
  %v1988 = vadd.f32 %v1987, %v1973
  %v1989 = vadd.f32 %v1988, %v1974
  %v1990 = vadd.f32 %v1989, %v1975
  %v1991 = vadd.f32 %v1990, %v1976
  %v1992 = vadd.f32 %v1991, %v1977
  %v1993 = vadd.f32 %v1992, %v1978
  %v1994 = vadd.f32 %v1993, %v1979
  %v1995 = vadd.f32 %v1994, %v1980
  %v1996 = vadd.f32 %v1995, %v1981
  %v1997 = vadd.f32 %v1996, %v1982
  %v1998 = vadd.f32 %v1997, %v1983
  %v1999 = vadd.f32 %v1998, %v1984
  %v2000 = vadd.f32 %v1999, %v1985
  %v2001 = vadd.f32 %v2000, %v1986
  %v2002 = vrot.slane %v2001, 4
  %v2003 = vadd.f32 %v2001, %v2002
  %v2004 = vrot.slane %v2003, 2
  %v2005 = vadd.f32 %v2003, %v2004
  %v2006 = vrot.slane %v2005, 1
  %v2007 = vadd.f32 %v2005, %v2006
  %v2008 = vmul.f32 %v2007, %v1953
  %v2009 = vld [vmem:[%s13] sm:$0x1]
  %v2010 = vadd.f32 %v2008, 1e-05
  %v2011 = vrsqrt.pop %v2010
  %v2012 = vmul.f32 %v2009, %v2011
  %v2013 = vld [vmem:[%s14] sm:$0x1]
  %v2014 = vmul.f32 %v1954, %v2012
  %v2015 = vsub.f32 %v2013, %v2014
  %v2017 = vlaneseq
  %v2018 = vshrl.u32 %v2017, 7
  %v2019 = vsub.s32 0, %v2018
  %v2020 = vrot.slane %v2012, %v2019
  %v2022 = vmul.f32 %v1854, %v2020
  %v2023 = vmul.f32 %v1859, %v2020
  %v2024 = vmul.f32 %v1864, %v2020
  %v2025 = vmul.f32 %v1869, %v2020
  %v2026 = vmul.f32 %v1874, %v2020
  %v2027 = vmul.f32 %v1879, %v2020
  %v2028 = vmul.f32 %v1884, %v2020
  %v2029 = vmul.f32 %v1889, %v2020
  %v2030 = vmul.f32 %v1894, %v2020
  %v2031 = vmul.f32 %v1899, %v2020
  %v2032 = vmul.f32 %v1904, %v2020
  %v2033 = vmul.f32 %v1909, %v2020
  %v2034 = vmul.f32 %v1914, %v2020
  %v2035 = vmul.f32 %v1919, %v2020
  %v2036 = vmul.f32 %v1924, %v2020
  %v2037 = vmul.f32 %v1929, %v2020
  %v2039 = vlaneseq
  %v2040 = vshrl.u32 %v2039, 7
  %v2041 = vsub.s32 0, %v2040
  %v2042 = vrot.slane %v2015, %v2041
  %v2044 = vadd.f32 %v2022, %v2042
  %v2045 = vadd.f32 %v2023, %v2042
  %v2046 = vadd.f32 %v2024, %v2042
  %v2047 = vadd.f32 %v2025, %v2042
  %v2048 = vadd.f32 %v2026, %v2042
  %v2049 = vadd.f32 %v2027, %v2042
  %v2050 = vadd.f32 %v2028, %v2042
  %v2051 = vadd.f32 %v2029, %v2042
  %v2052 = vadd.f32 %v2030, %v2042
  %v2053 = vadd.f32 %v2031, %v2042
  %v2054 = vadd.f32 %v2032, %v2042
  %v2055 = vadd.f32 %v2033, %v2042
  %v2056 = vadd.f32 %v2034, %v2042
  %v2057 = vadd.f32 %v2035, %v2042
  %v2058 = vadd.f32 %v2036, %v2042
  %v2059 = vadd.f32 %v2037, %v2042
  %v2060 = vsel %vm81, %v2044, -inf
  %2061 = vmax.xlane.f32.xlu0 %v2060
  %v2062 = vpop.xlane.xlu0 %2061
  %v2063 = vsel %vm81, %v2045, -inf
  %2064 = vmax.xlane.f32.xlu0 %v2063
  %v2065 = vpop.xlane.xlu0 %2064
  %v2066 = vsel %vm81, %v2046, -inf
  %2067 = vmax.xlane.f32.xlu0 %v2066
  %v2068 = vpop.xlane.xlu0 %2067
  %v2069 = vsel %vm81, %v2047, -inf
  %2070 = vmax.xlane.f32.xlu0 %v2069
  %v2071 = vpop.xlane.xlu0 %2070
  %v2072 = vsel %vm81, %v2048, -inf
  %2073 = vmax.xlane.f32.xlu0 %v2072
  %v2074 = vpop.xlane.xlu0 %2073
  %v2075 = vsel %vm81, %v2049, -inf
  %2076 = vmax.xlane.f32.xlu0 %v2075
  %v2077 = vpop.xlane.xlu0 %2076
  %v2078 = vsel %vm81, %v2050, -inf
  %2079 = vmax.xlane.f32.xlu0 %v2078
  %v2080 = vpop.xlane.xlu0 %2079
  %v2081 = vsel %vm81, %v2051, -inf
  %2082 = vmax.xlane.f32.xlu0 %v2081
  %v2083 = vpop.xlane.xlu0 %2082
  %v2084 = vsel %vm81, %v2052, -inf
  %2085 = vmax.xlane.f32.xlu0 %v2084
  %v2086 = vpop.xlane.xlu0 %2085
  %v2087 = vsel %vm81, %v2053, -inf
  %2088 = vmax.xlane.f32.xlu0 %v2087
  %v2089 = vpop.xlane.xlu0 %2088
  %v2090 = vsel %vm81, %v2054, -inf
  %2091 = vmax.xlane.f32.xlu0 %v2090
  %v2092 = vpop.xlane.xlu0 %2091
  %v2093 = vsel %vm81, %v2055, -inf
  %2094 = vmax.xlane.f32.xlu0 %v2093
  %v2095 = vpop.xlane.xlu0 %2094
  %v2096 = vsel %vm81, %v2056, -inf
  %2097 = vmax.xlane.f32.xlu0 %v2096
  %v2098 = vpop.xlane.xlu0 %2097
  %v2099 = vsel %vm81, %v2057, -inf
  %2100 = vmax.xlane.f32.xlu0 %v2099
  %v2101 = vpop.xlane.xlu0 %2100
  %v2102 = vsel %vm81, %v2058, -inf
  %2103 = vmax.xlane.f32.xlu0 %v2102
  %v2104 = vpop.xlane.xlu0 %2103
  %v2105 = vsel %vm81, %v2059, -inf
  %2106 = vmax.xlane.f32.xlu0 %v2105
  %v2107 = vpop.xlane.xlu0 %2106
  %v2108 = vsub.f32 %v2044, %v2062
  %v2109 = vsub.f32 %v2045, %v2065
  %v2110 = vsub.f32 %v2046, %v2068
  %v2111 = vsub.f32 %v2047, %v2071
  %v2112 = vsub.f32 %v2048, %v2074
  %v2113 = vsub.f32 %v2049, %v2077
  %v2114 = vsub.f32 %v2050, %v2080
  %v2115 = vsub.f32 %v2051, %v2083
  %v2116 = vsub.f32 %v2052, %v2086
  %v2117 = vsub.f32 %v2053, %v2089
  %v2118 = vsub.f32 %v2054, %v2092
  %v2119 = vsub.f32 %v2055, %v2095
  %v2120 = vsub.f32 %v2056, %v2098
  %v2121 = vsub.f32 %v2057, %v2101
  %v2122 = vsub.f32 %v2058, %v2104
  %v2123 = vsub.f32 %v2059, %v2107
  %v2124 = vmul.f32 %v2108, 1.442695
  %v2125 = vpow.pop %v2124
  %v2126 = vmul.f32 %v2109, 1.442695
  %v2127 = vpow.pop %v2126
  %v2128 = vmul.f32 %v2110, 1.442695
  %v2129 = vpow.pop %v2128
  %v2130 = vmul.f32 %v2111, 1.442695
  %v2131 = vpow.pop %v2130
  %v2132 = vmul.f32 %v2112, 1.442695
  %v2133 = vpow.pop %v2132
  %v2134 = vmul.f32 %v2113, 1.442695
  %v2135 = vpow.pop %v2134
  %v2136 = vmul.f32 %v2114, 1.442695
  %v2137 = vpow.pop %v2136
  %v2138 = vmul.f32 %v2115, 1.442695
  %v2139 = vpow.pop %v2138
  %v2140 = vmul.f32 %v2116, 1.442695
  %v2141 = vpow.pop %v2140
  %v2142 = vmul.f32 %v2117, 1.442695
  %v2143 = vpow.pop %v2142
  %v2144 = vmul.f32 %v2118, 1.442695
  %v2145 = vpow.pop %v2144
  %v2146 = vmul.f32 %v2119, 1.442695
  %v2147 = vpow.pop %v2146
  %v2148 = vmul.f32 %v2120, 1.442695
  %v2149 = vpow.pop %v2148
  %v2150 = vmul.f32 %v2121, 1.442695
  %v2151 = vpow.pop %v2150
  %v2152 = vmul.f32 %v2122, 1.442695
  %v2153 = vpow.pop %v2152
  %v2154 = vmul.f32 %v2123, 1.442695
  %v2155 = vpow.pop %v2154
  %v2156 = vsel %vm81, %v2125, 0.0
  %2157 = vadd.xlane.f32.xlu0 %v2156
  %v2158 = vpop.xlane.xlu0 %2157
  %v2159 = vsel %vm81, %v2127, 0.0
  %2160 = vadd.xlane.f32.xlu0 %v2159
  %v2161 = vpop.xlane.xlu0 %2160
  %v2162 = vsel %vm81, %v2129, 0.0
  %2163 = vadd.xlane.f32.xlu0 %v2162
  %v2164 = vpop.xlane.xlu0 %2163
  %v2165 = vsel %vm81, %v2131, 0.0
  %2166 = vadd.xlane.f32.xlu0 %v2165
  %v2167 = vpop.xlane.xlu0 %2166
  %v2168 = vsel %vm81, %v2133, 0.0
  %2169 = vadd.xlane.f32.xlu0 %v2168
  %v2170 = vpop.xlane.xlu0 %2169
  %v2171 = vsel %vm81, %v2135, 0.0
  %2172 = vadd.xlane.f32.xlu0 %v2171
  %v2173 = vpop.xlane.xlu0 %2172
  %v2174 = vsel %vm81, %v2137, 0.0
  %2175 = vadd.xlane.f32.xlu0 %v2174
  %v2176 = vpop.xlane.xlu0 %2175
  %v2177 = vsel %vm81, %v2139, 0.0
  %2178 = vadd.xlane.f32.xlu0 %v2177
  %v2179 = vpop.xlane.xlu0 %2178
  %v2180 = vsel %vm81, %v2141, 0.0
  %2181 = vadd.xlane.f32.xlu0 %v2180
  %v2182 = vpop.xlane.xlu0 %2181
  %v2183 = vsel %vm81, %v2143, 0.0
  %2184 = vadd.xlane.f32.xlu0 %v2183
  %v2185 = vpop.xlane.xlu0 %2184
  %v2186 = vsel %vm81, %v2145, 0.0
  %2187 = vadd.xlane.f32.xlu0 %v2186
  %v2188 = vpop.xlane.xlu0 %2187
  %v2189 = vsel %vm81, %v2147, 0.0
  %2190 = vadd.xlane.f32.xlu0 %v2189
  %v2191 = vpop.xlane.xlu0 %2190
  %v2192 = vsel %vm81, %v2149, 0.0
  %2193 = vadd.xlane.f32.xlu0 %v2192
  %v2194 = vpop.xlane.xlu0 %2193
  %v2195 = vsel %vm81, %v2151, 0.0
  %2196 = vadd.xlane.f32.xlu0 %v2195
  %v2197 = vpop.xlane.xlu0 %2196
  %v2198 = vsel %vm81, %v2153, 0.0
  %2199 = vadd.xlane.f32.xlu0 %v2198
  %v2200 = vpop.xlane.xlu0 %2199
  %v2201 = vsel %vm81, %v2155, 0.0
  %2202 = vadd.xlane.f32.xlu0 %v2201
  %v2203 = vpop.xlane.xlu0 %2202
  %v2204 = vrcp.pop %v2158
  %v2205 = vrcp.pop %v2161
  %v2206 = vrcp.pop %v2164
  %v2207 = vrcp.pop %v2167
  %v2208 = vrcp.pop %v2170
  %v2209 = vrcp.pop %v2173
  %v2210 = vrcp.pop %v2176
  %v2211 = vrcp.pop %v2179
  %v2212 = vrcp.pop %v2182
  %v2213 = vrcp.pop %v2185
  %v2214 = vrcp.pop %v2188
  %v2215 = vrcp.pop %v2191
  %v2216 = vrcp.pop %v2194
  %v2217 = vrcp.pop %v2197
  %v2218 = vrcp.pop %v2200
  %v2219 = vrcp.pop %v2203
  %v2220 = vmul.f32 %v2125, %v2204
  %v2221 = vmul.f32 %v2127, %v2205
  %v2222 = vmul.f32 %v2129, %v2206
  %v2223 = vmul.f32 %v2131, %v2207
  %v2224 = vmul.f32 %v2133, %v2208
  %v2225 = vmul.f32 %v2135, %v2209
  %v2226 = vmul.f32 %v2137, %v2210
  %v2227 = vmul.f32 %v2139, %v2211
  %v2228 = vmul.f32 %v2141, %v2212
  %v2229 = vmul.f32 %v2143, %v2213
  %v2230 = vmul.f32 %v2145, %v2214
  %v2231 = vmul.f32 %v2147, %v2215
  %v2232 = vmul.f32 %v2149, %v2216
  %v2233 = vmul.f32 %v2151, %v2217
  %v2234 = vmul.f32 %v2153, %v2218
  %v2235 = vmul.f32 %v2155, %v2219
  %vm2236 = vcmask 1048064
  %v2237 = vsel %vm2236, %v2044, -inf
  %2238 = vmax.xlane.f32.xlu0 %v2237
  %v2239 = vpop.xlane.xlu0 %2238
  %v2240 = vsel %vm2236, %v2045, -inf
  %2241 = vmax.xlane.f32.xlu0 %v2240
  %v2242 = vpop.xlane.xlu0 %2241
  %v2243 = vsel %vm2236, %v2046, -inf
  %2244 = vmax.xlane.f32.xlu0 %v2243
  %v2245 = vpop.xlane.xlu0 %2244
  %v2246 = vsel %vm2236, %v2047, -inf
  %2247 = vmax.xlane.f32.xlu0 %v2246
  %v2248 = vpop.xlane.xlu0 %2247
  %v2249 = vsel %vm2236, %v2048, -inf
  %2250 = vmax.xlane.f32.xlu0 %v2249
  %v2251 = vpop.xlane.xlu0 %2250
  %v2252 = vsel %vm2236, %v2049, -inf
  %2253 = vmax.xlane.f32.xlu0 %v2252
  %v2254 = vpop.xlane.xlu0 %2253
  %v2255 = vsel %vm2236, %v2050, -inf
  %2256 = vmax.xlane.f32.xlu0 %v2255
  %v2257 = vpop.xlane.xlu0 %2256
  %v2258 = vsel %vm2236, %v2051, -inf
  %2259 = vmax.xlane.f32.xlu0 %v2258
  %v2260 = vpop.xlane.xlu0 %2259
  %v2261 = vsel %vm2236, %v2052, -inf
  %2262 = vmax.xlane.f32.xlu0 %v2261
  %v2263 = vpop.xlane.xlu0 %2262
  %v2264 = vsel %vm2236, %v2053, -inf
  %2265 = vmax.xlane.f32.xlu0 %v2264
  %v2266 = vpop.xlane.xlu0 %2265
  %v2267 = vsel %vm2236, %v2054, -inf
  %2268 = vmax.xlane.f32.xlu0 %v2267
  %v2269 = vpop.xlane.xlu0 %2268
  %v2270 = vsel %vm2236, %v2055, -inf
  %2271 = vmax.xlane.f32.xlu0 %v2270
  %v2272 = vpop.xlane.xlu0 %2271
  %v2273 = vsel %vm2236, %v2056, -inf
  %2274 = vmax.xlane.f32.xlu0 %v2273
  %v2275 = vpop.xlane.xlu0 %2274
  %v2276 = vsel %vm2236, %v2057, -inf
  %2277 = vmax.xlane.f32.xlu0 %v2276
  %v2278 = vpop.xlane.xlu0 %2277
  %v2279 = vsel %vm2236, %v2058, -inf
  %2280 = vmax.xlane.f32.xlu0 %v2279
  %v2281 = vpop.xlane.xlu0 %2280
  %v2282 = vsel %vm2236, %v2059, -inf
  %2283 = vmax.xlane.f32.xlu0 %v2282
  %v2284 = vpop.xlane.xlu0 %2283
  %v2285 = vsub.f32 %v2044, %v2239
  %v2286 = vsub.f32 %v2045, %v2242
  %v2287 = vsub.f32 %v2046, %v2245
  %v2288 = vsub.f32 %v2047, %v2248
  %v2289 = vsub.f32 %v2048, %v2251
  %v2290 = vsub.f32 %v2049, %v2254
  %v2291 = vsub.f32 %v2050, %v2257
  %v2292 = vsub.f32 %v2051, %v2260
  %v2293 = vsub.f32 %v2052, %v2263
  %v2294 = vsub.f32 %v2053, %v2266
  %v2295 = vsub.f32 %v2054, %v2269
  %v2296 = vsub.f32 %v2055, %v2272
  %v2297 = vsub.f32 %v2056, %v2275
  %v2298 = vsub.f32 %v2057, %v2278
  %v2299 = vsub.f32 %v2058, %v2281
  %v2300 = vsub.f32 %v2059, %v2284
  %v2301 = vmul.f32 %v2285, 1.442695
  %v2302 = vpow.pop %v2301
  %v2303 = vmul.f32 %v2286, 1.442695
  %v2304 = vpow.pop %v2303
  %v2305 = vmul.f32 %v2287, 1.442695
  %v2306 = vpow.pop %v2305
  %v2307 = vmul.f32 %v2288, 1.442695
  %v2308 = vpow.pop %v2307
  %v2309 = vmul.f32 %v2289, 1.442695
  %v2310 = vpow.pop %v2309
  %v2311 = vmul.f32 %v2290, 1.442695
  %v2312 = vpow.pop %v2311
  %v2313 = vmul.f32 %v2291, 1.442695
  %v2314 = vpow.pop %v2313
  %v2315 = vmul.f32 %v2292, 1.442695
  %v2316 = vpow.pop %v2315
  %v2317 = vmul.f32 %v2293, 1.442695
  %v2318 = vpow.pop %v2317
  %v2319 = vmul.f32 %v2294, 1.442695
  %v2320 = vpow.pop %v2319
  %v2321 = vmul.f32 %v2295, 1.442695
  %v2322 = vpow.pop %v2321
  %v2323 = vmul.f32 %v2296, 1.442695
  %v2324 = vpow.pop %v2323
  %v2325 = vmul.f32 %v2297, 1.442695
  %v2326 = vpow.pop %v2325
  %v2327 = vmul.f32 %v2298, 1.442695
  %v2328 = vpow.pop %v2327
  %v2329 = vmul.f32 %v2299, 1.442695
  %v2330 = vpow.pop %v2329
  %v2331 = vmul.f32 %v2300, 1.442695
  %v2332 = vpow.pop %v2331
  %2349 = vrot.lane.b32.xlu0 %v2302, 64
  %v2350 = vpop.permute.xlu0 %2349
  %2351 = vrot.lane.b32.xlu0 %v2304, 64
  %v2352 = vpop.permute.xlu0 %2351
  %2353 = vrot.lane.b32.xlu0 %v2306, 64
  %v2354 = vpop.permute.xlu0 %2353
  %2355 = vrot.lane.b32.xlu0 %v2308, 64
  %v2356 = vpop.permute.xlu0 %2355
  %2357 = vrot.lane.b32.xlu0 %v2310, 64
  %v2358 = vpop.permute.xlu0 %2357
  %2359 = vrot.lane.b32.xlu0 %v2312, 64
  %v2360 = vpop.permute.xlu0 %2359
  %2361 = vrot.lane.b32.xlu0 %v2314, 64
  %v2362 = vpop.permute.xlu0 %2361
  %2363 = vrot.lane.b32.xlu0 %v2316, 64
  %v2364 = vpop.permute.xlu0 %2363
  %2365 = vrot.lane.b32.xlu0 %v2318, 64
  %v2366 = vpop.permute.xlu0 %2365
  %2367 = vrot.lane.b32.xlu0 %v2320, 64
  %v2368 = vpop.permute.xlu0 %2367
  %2369 = vrot.lane.b32.xlu0 %v2322, 64
  %v2370 = vpop.permute.xlu0 %2369
  %2371 = vrot.lane.b32.xlu0 %v2324, 64
  %v2372 = vpop.permute.xlu0 %2371
  %2373 = vrot.lane.b32.xlu0 %v2326, 64
  %v2374 = vpop.permute.xlu0 %2373
  %2375 = vrot.lane.b32.xlu0 %v2328, 64
  %v2376 = vpop.permute.xlu0 %2375
  %2377 = vrot.lane.b32.xlu0 %v2330, 64
  %v2378 = vpop.permute.xlu0 %2377
  %2379 = vrot.lane.b32.xlu0 %v2332, 64
  %v2380 = vpop.permute.xlu0 %2379
  %v2397 = vsel %vm81, %v2350, 0.0
  %2398 = vadd.xlane.f32.xlu0 %v2397
  %v2399 = vpop.xlane.xlu0 %2398
  %v2400 = vsel %vm81, %v2352, 0.0
  %2401 = vadd.xlane.f32.xlu0 %v2400
  %v2402 = vpop.xlane.xlu0 %2401
  %v2403 = vsel %vm81, %v2354, 0.0
  %2404 = vadd.xlane.f32.xlu0 %v2403
  %v2405 = vpop.xlane.xlu0 %2404
  %v2406 = vsel %vm81, %v2356, 0.0
  %2407 = vadd.xlane.f32.xlu0 %v2406
  %v2408 = vpop.xlane.xlu0 %2407
  %v2409 = vsel %vm81, %v2358, 0.0
  %2410 = vadd.xlane.f32.xlu0 %v2409
  %v2411 = vpop.xlane.xlu0 %2410
  %v2412 = vsel %vm81, %v2360, 0.0
  %2413 = vadd.xlane.f32.xlu0 %v2412
  %v2414 = vpop.xlane.xlu0 %2413
  %v2415 = vsel %vm81, %v2362, 0.0
  %2416 = vadd.xlane.f32.xlu0 %v2415
  %v2417 = vpop.xlane.xlu0 %2416
  %v2418 = vsel %vm81, %v2364, 0.0
  %2419 = vadd.xlane.f32.xlu0 %v2418
  %v2420 = vpop.xlane.xlu0 %2419
  %v2421 = vsel %vm81, %v2366, 0.0
  %2422 = vadd.xlane.f32.xlu0 %v2421
  %v2423 = vpop.xlane.xlu0 %2422
  %v2424 = vsel %vm81, %v2368, 0.0
  %2425 = vadd.xlane.f32.xlu0 %v2424
  %v2426 = vpop.xlane.xlu0 %2425
  %v2427 = vsel %vm81, %v2370, 0.0
  %2428 = vadd.xlane.f32.xlu0 %v2427
  %v2429 = vpop.xlane.xlu0 %2428
  %v2430 = vsel %vm81, %v2372, 0.0
  %2431 = vadd.xlane.f32.xlu0 %v2430
  %v2432 = vpop.xlane.xlu0 %2431
  %v2433 = vsel %vm81, %v2374, 0.0
  %2434 = vadd.xlane.f32.xlu0 %v2433
  %v2435 = vpop.xlane.xlu0 %2434
  %v2436 = vsel %vm81, %v2376, 0.0
  %2437 = vadd.xlane.f32.xlu0 %v2436
  %v2438 = vpop.xlane.xlu0 %2437
  %v2439 = vsel %vm81, %v2378, 0.0
  %2440 = vadd.xlane.f32.xlu0 %v2439
  %v2441 = vpop.xlane.xlu0 %2440
  %v2442 = vsel %vm81, %v2380, 0.0
  %2443 = vadd.xlane.f32.xlu0 %v2442
  %v2444 = vpop.xlane.xlu0 %2443
  %v2445 = vrcp.pop %v2399
  %v2446 = vrcp.pop %v2402
  %v2447 = vrcp.pop %v2405
  %v2448 = vrcp.pop %v2408
  %v2449 = vrcp.pop %v2411
  %v2450 = vrcp.pop %v2414
  %v2451 = vrcp.pop %v2417
  %v2452 = vrcp.pop %v2420
  %v2453 = vrcp.pop %v2423
  %v2454 = vrcp.pop %v2426
  %v2455 = vrcp.pop %v2429
  %v2456 = vrcp.pop %v2432
  %v2457 = vrcp.pop %v2435
  %v2458 = vrcp.pop %v2438
  %v2459 = vrcp.pop %v2441
  %v2460 = vrcp.pop %v2444
  %v2461 = vmul.f32 %v2302, %v2445
  %v2462 = vmul.f32 %v2304, %v2446
  %v2463 = vmul.f32 %v2306, %v2447
  %v2464 = vmul.f32 %v2308, %v2448
  %v2465 = vmul.f32 %v2310, %v2449
  %v2466 = vmul.f32 %v2312, %v2450
  %v2467 = vmul.f32 %v2314, %v2451
  %v2468 = vmul.f32 %v2316, %v2452
  %v2469 = vmul.f32 %v2318, %v2453
  %v2470 = vmul.f32 %v2320, %v2454
  %v2471 = vmul.f32 %v2322, %v2455
  %v2472 = vmul.f32 %v2324, %v2456
  %v2473 = vmul.f32 %v2326, %v2457
  %v2474 = vmul.f32 %v2328, %v2458
  %v2475 = vmul.f32 %v2330, %v2459
  %v2476 = vmul.f32 %v2332, %v2460
  %2493 = vrot.lane.b32.xlu0 %v2461, 64
  %v2494 = vpop.permute.xlu0 %2493
  %2495 = vrot.lane.b32.xlu0 %v2462, 64
  %v2496 = vpop.permute.xlu0 %2495
  %2497 = vrot.lane.b32.xlu0 %v2463, 64
  %v2498 = vpop.permute.xlu0 %2497
  %2499 = vrot.lane.b32.xlu0 %v2464, 64
  %v2500 = vpop.permute.xlu0 %2499
  %2501 = vrot.lane.b32.xlu0 %v2465, 64
  %v2502 = vpop.permute.xlu0 %2501
  %2503 = vrot.lane.b32.xlu0 %v2466, 64
  %v2504 = vpop.permute.xlu0 %2503
  %2505 = vrot.lane.b32.xlu0 %v2467, 64
  %v2506 = vpop.permute.xlu0 %2505
  %2507 = vrot.lane.b32.xlu0 %v2468, 64
  %v2508 = vpop.permute.xlu0 %2507
  %2509 = vrot.lane.b32.xlu0 %v2469, 64
  %v2510 = vpop.permute.xlu0 %2509
  %2511 = vrot.lane.b32.xlu0 %v2470, 64
  %v2512 = vpop.permute.xlu0 %2511
  %2513 = vrot.lane.b32.xlu0 %v2471, 64
  %v2514 = vpop.permute.xlu0 %2513
  %2515 = vrot.lane.b32.xlu0 %v2472, 64
  %v2516 = vpop.permute.xlu0 %2515
  %2517 = vrot.lane.b32.xlu0 %v2473, 64
  %v2518 = vpop.permute.xlu0 %2517
  %2519 = vrot.lane.b32.xlu0 %v2474, 64
  %v2520 = vpop.permute.xlu0 %2519
  %2521 = vrot.lane.b32.xlu0 %v2475, 64
  %v2522 = vpop.permute.xlu0 %2521
  %2523 = vrot.lane.b32.xlu0 %v2476, 64
  %v2524 = vpop.permute.xlu0 %2523
  %v2541 = vadd.f32 %v2220, %v2494
  %v2542 = vadd.f32 %v2221, %v2496
  %v2543 = vadd.f32 %v2222, %v2498
  %v2544 = vadd.f32 %v2223, %v2500
  %v2545 = vadd.f32 %v2224, %v2502
  %v2546 = vadd.f32 %v2225, %v2504
  %v2547 = vadd.f32 %v2226, %v2506
  %v2548 = vadd.f32 %v2227, %v2508
  %v2549 = vadd.f32 %v2228, %v2510
  %v2550 = vadd.f32 %v2229, %v2512
  %v2551 = vadd.f32 %v2230, %v2514
  %v2552 = vadd.f32 %v2231, %v2516
  %v2553 = vadd.f32 %v2232, %v2518
  %v2554 = vadd.f32 %v2233, %v2520
  %v2555 = vadd.f32 %v2234, %v2522
  %v2556 = vadd.f32 %v2235, %v2524
  %2557 = vst.msk [vmem:[%s15] sm:$0xff] %vm81, %v2541
  %2558 = vst.msk [vmem:[%s15 + $0x8] sm:$0xff] %vm81, %v2542
  %2559 = vst.msk [vmem:[%s15 + $0x10] sm:$0xff] %vm81, %v2543
  %2560 = vst.msk [vmem:[%s15 + $0x18] sm:$0xff] %vm81, %v2544
  %2561 = vst.msk [vmem:[%s15 + $0x20] sm:$0xff] %vm81, %v2545
  %2562 = vst.msk [vmem:[%s15 + $0x28] sm:$0xff] %vm81, %v2546
  %2563 = vst.msk [vmem:[%s15 + $0x30] sm:$0xff] %vm81, %v2547
  %2564 = vst.msk [vmem:[%s15 + $0x38] sm:$0xff] %vm81, %v2548
  %2565 = vst.msk [vmem:[%s15 + $0x40] sm:$0xff] %vm81, %v2549
  %2566 = vst.msk [vmem:[%s15 + $0x48] sm:$0xff] %vm81, %v2550
  %2567 = vst.msk [vmem:[%s15 + $0x50] sm:$0xff] %vm81, %v2551
  %2568 = vst.msk [vmem:[%s15 + $0x58] sm:$0xff] %vm81, %v2552
  %2569 = vst.msk [vmem:[%s15 + $0x60] sm:$0xff] %vm81, %v2553
  %2570 = vst.msk [vmem:[%s15 + $0x68] sm:$0xff] %vm81, %v2554
  %2571 = vst.msk [vmem:[%s15 + $0x70] sm:$0xff] %vm81, %v2555
  %2572 = vst.msk [vmem:[%s15 + $0x78] sm:$0xff] %vm81, %v2556
  // Predicated region
  $region62: #{oivae_forward.1} parent=0 // pred_check
    _
  $region63: #{oivae_forward.1} parent=0 // pred_check_branch
    %2574 = sbr.rel (0) target = $region65
  $region64: #{oivae_forward.1} parent=0 // pred_region
    _
  $region65: #{oivae_forward.1} parent=0 // pred_fallthru
    _
  // Predicated region
  $region66: #{oivae_forward.1} parent=0 // pred_check
    _
  $region67: #{oivae_forward.1} parent=0 // pred_check_branch
    %2576 = sbr.rel (0) target = $region69
  $region68: #{oivae_forward.1} parent=0 // pred_region
    _
  $region69: #{oivae_forward.1} parent=0 // pred_fallthru
    _

</llo_original>
